<compile_context>
chip_gen: v6e
topology: v6e:2x2x1
jax: 0.10.0
libtpu: 0.0.40
codegen_flags: <defaults>
</compile_context>

<pallas_src>
import functools

import numpy as np
import jax
import jax.numpy as jnp
from jax import lax
from jax.experimental import pallas as pl
from jax.experimental.pallas import tpu as pltpu


# ----------------------------- tiling constants -----------------------------
SEG_TN = 512        # segment-mean: points per tile (reduction axis)
SEG_TM = 512        # segment-mean: segments per tile (output axis)
NEAR_TN = 512       # nearest: points per tile (lanes, output axis)
NEAR_TM = 512       # nearest: superpoints per tile (sublanes, reduction axis)
PAD_MIN = 512       # power-of-two bucket floor (multiple of every tile above)
VMEM_LIMIT = 32 * 1024 * 1024   # > v5e's 16 MiB default, safe on v7x's 64 MiB


def _next_pow2(n):
    n = max(int(n), 1)
    return 1 << (n - 1).bit_length()


def _bucket(n):
    # power-of-two bucketing (>= PAD_MIN) so recompiles only happen when a size
    # crosses a power-of-two boundary (compile-cache reuse across inputs)
    return max(PAD_MIN, _next_pow2(n))


# ---------------------------------------------------------------------------
# Pallas kernel 1: tiled segment (scatter) mean via one-hot matmul on the MXU.
#   grid = (segment tiles ["parallel"], point tiles ["arbitrary" reduction]);
#   the output block is resident across the reduction axis and doubles as the
#   f32 accumulator.  Counts are carried as extra ones/indicator columns of x
#   so they come out of the same MXU pass.
# Finalize: columns are split into three static ranges
#   [0, s1) / [s1, s2) / [s2, C)
# each with its own count column (cnt_cols) and its own additive init (inits):
#   out[v, c] = (init_r(c) + sum_{i: cluster[i]==v} x[i, c]) / max(count_r(c)[v], 1)
# init=1.0 on a range reproduces torch_scatter.scatter(..., out=torch.ones(...),
# 'mean') (the pre-initialised ones are folded into the divided numerator;
# untouched rows stay at 1 because their count clamps to 1).
# ---------------------------------------------------------------------------
def _segment_mean_kernel(x_ref, cl_ref, out_ref, *, splits, cnt_cols, inits):
    mi = pl.program_id(0)                 # segment-tile index
    ni = pl.program_id(1)                 # point-tile index (reduction)
    tm = out_ref.shape[0]
    nt = x_ref.shape[0]

    @pl.when(ni == 0)
    def _():
        out_ref[...] = jnp.zeros_like(out_ref)

    x = x_ref[...]                                        # (nt, C)
    cl = cl_ref[...]                                      # (1, nt) int32 global ids
    seg = lax.broadcasted_iota(jnp.int32, (tm, nt), 0) + mi * tm
    onehot_t = (seg == cl).astype(jnp.float32)            # (tm, nt)
    out_ref[...] += jnp.dot(onehot_t, x, preferred_element_type=jnp.float32)

    @pl.when(ni == pl.num_programs(1) - 1)
    def _():
        s1, s2 = splits
        a0, a1, a2 = cnt_cols
        i0, i1, i2 = inits
        acc = out_ref[...]
        cnt0 = jnp.maximum(acc[:, a0:a0 + 1], 1.0)        # (tm, 1) counts from MXU
        cnt1 = jnp.maximum(acc[:, a1:a1 + 1], 1.0)
        cnt2 = jnp.maximum(acc[:, a2:a2 + 1], 1.0)
        cols = lax.broadcasted_iota(jnp.int32, acc.shape, 1)
        div = jnp.where(cols < s1, cnt0, jnp.where(cols < s2, cnt1, cnt2))
        ini = jnp.where(cols < s1, jnp.float32(i0),
                        jnp.where(cols < s2, jnp.float32(i1), jnp.float32(i2)))
        out_ref[...] = (ini + acc) / div


@functools.partial(jax.jit,
                   static_argnames=("m_pad", "splits", "cnt_cols", "inits"))
def segment_mean_padded(x_pad, cl_pad, *, m_pad, splits, cnt_cols, inits):
    n_pad, c_pad = x_pad.shape
    nt, tm = SEG_TN, SEG_TM
    grid = (m_pad // tm, n_pad // nt)
    return pl.pallas_call(
        functools.partial(_segment_mean_kernel, splits=splits,
                          cnt_cols=cnt_cols, inits=inits),
        out_shape=jax.ShapeDtypeStruct((m_pad, c_pad), jnp.float32),
        grid=grid,
        in_specs=[pl.BlockSpec((nt, c_pad), lambda mi, ni: (ni, 0)),
                  pl.BlockSpec((1, nt), lambda mi, ni: (0, ni))],
        out_specs=pl.BlockSpec((tm, c_pad), lambda mi, ni: (mi, 0)),
        compiler_params=pltpu.CompilerParams(
            dimension_semantics=("parallel", "arbitrary"),
            vmem_limit_bytes=VMEM_LIMIT),
    )(x_pad, cl_pad)


# ---------------------------------------------------------------------------
# Pallas kernel 2: nearest superpoint with matching batch id (tiled).
#   grid = (point tiles ["parallel"], superpoint tiles ["arbitrary" reduction]);
#   running per-point min distance lives in a (1, tn) VMEM scratch and the
#   running argmin lives directly in the lane-dense (1, tn) int32 output block
#   (output resident across the reduction axis).  True squared distance is
#   accumulated per coordinate; cross-batch / padded pairs are masked to 1e30.
# ---------------------------------------------------------------------------
def _nearest_kernel(pos_t_ref, spt_ref, pbatch_ref, sbatch_ref, out_ref,
                    dmin_ref, *, dims):
    mi = pl.program_id(1)                 # superpoint-tile index (reduction)
    tm = spt_ref.shape[0]
    tn = pos_t_ref.shape[1]

    @pl.when(mi == 0)
    def _():
        dmin_ref[...] = jnp.full_like(dmin_ref, jnp.inf)
        out_ref[...] = jnp.zeros_like(out_ref)

    spt = spt_ref[...]                    # (tm, D')  superpoints on sublanes
    post = pos_t_ref[...]                 # (D', tn)  points on lanes
    d = jnp.zeros((tm, tn), jnp.float32)
    for k in range(dims):                 # D = 3, static unroll
        diff = spt[:, k:k + 1] - post[k:k + 1, :]          # (tm,1)-(1,tn)->(tm,tn)
        d = d + diff * diff
    same = sbatch_ref[...] == pbatch_ref[...]              # (tm,1)==(1,tn)->(tm,tn)
    d = jnp.where(same, d, jnp.float32(1e30))

    tile_min = jnp.min(d, axis=0, keepdims=True)           # (1, tn)
    rows = lax.broadcasted_iota(jnp.int32, d.shape, 0)
    tile_arg = jnp.min(jnp.where(d <= tile_min, rows, jnp.int32(2 ** 30)),
                       axis=0, keepdims=True) + mi * tm    # (1, tn) global index

    better = tile_min < dmin_ref[...]                      # strict < keeps 1st tile on ties
    out_ref[...] = jnp.where(better, tile_arg, out_ref[...])
    dmin_ref[...] = jnp.minimum(dmin_ref[...], tile_min)


@functools.partial(jax.jit, static_argnames=("dims",))
def nearest_padded(pos_t_pad, spt_pad, pbatch_pad, sbatch_pad, *, dims):
    dp, n_pad = pos_t_pad.shape
    m_pad, dps = spt_pad.shape
    tn, tm = NEAR_TN, NEAR_TM
    grid = (n_pad // tn, m_pad // tm)
    return pl.pallas_call(
        functools.partial(_nearest_kernel, dims=int(dims)),
        out_shape=jax.ShapeDtypeStruct((1, n_pad), jnp.int32),
        grid=grid,
        in_specs=[pl.BlockSpec((dp, tn), lambda ni, mi: (0, ni)),
                  pl.BlockSpec((tm, dps), lambda ni, mi: (mi, 0)),
                  pl.BlockSpec((1, tn), lambda ni, mi: (0, ni)),
                  pl.BlockSpec((tm, 1), lambda ni, mi: (mi, 0))],
        out_specs=pl.BlockSpec((1, tn), lambda ni, mi: (0, ni)),
        scratch_shapes=[pltpu.VMEM((1, tn), jnp.float32)],
        compiler_params=pltpu.CompilerParams(
            dimension_semantics=("parallel", "arbitrary"),
            vmem_limit_bytes=VMEM_LIMIT),
    )(pos_t_pad, spt_pad, pbatch_pad, sbatch_pad)


# ------------------- convenience wrappers (used by the checks) ---------------
def segment_mean_host(x, cluster, num_segments, init=0.0):
    x = np.asarray(x, np.float32)
    cluster = np.asarray(cluster, np.int64)
    n, c = x.shape
    n_pad, m_pad = _bucket(n), _bucket(num_segments)
    xp = np.zeros((n_pad, c + 1), np.float32)
    xp[:n, :c] = x
    xp[:n, c] = 1.0                                   # count column (rides the MXU)
    clp = np.full((1, n_pad), m_pad, np.int32)        # sentinel -> no segment
    clp[0, :n] = cluster
    out = segment_mean_padded(jnp.asarray(xp), jnp.asarray(clp), m_pad=m_pad,
                              splits=(c + 1, c + 1), cnt_cols=(c, c, c),
                              inits=(float(init),) * 3)
    return np.asarray(out)[:num_segments, :c]


def nearest_host(pos, spt, pbatch, sbatch):
    pos = np.asarray(pos, np.float32)
    spt = np.asarray(spt, np.float32)
    n, d = pos.shape
    m = spt.shape[0]
    n_pad, m_pad = _bucket(n), _bucket(m)
    pt = np.zeros((d, n_pad), np.float32); pt[:, :n] = pos.T
    sp = np.zeros((m_pad, d), np.float32); sp[:m] = spt
    pb = np.full((1, n_pad), -1, np.int32); pb[0, :n] = pbatch
    sb = np.full((m_pad, 1), -2, np.int32); sb[:m, 0] = sbatch
    out = nearest_padded(jnp.asarray(pt), jnp.asarray(sp), jnp.asarray(pb),
                         jnp.asarray(sb), dims=d)
    return np.asarray(out)[0, :n]


# ---------------------------------------------------------------------------
# Host-side glue replicating torch_geometric voxel_grid / consecutive_cluster.
# TODO(synk): sort / unique / consecutive relabeling / voxel hashing have
# data-dependent output sizes; kept as host-side numpy glue (no clean Pallas
# equivalent).
# ---------------------------------------------------------------------------
def _voxel_grid_cluster(pos, batch, size, start, end):
    pos4 = np.concatenate([pos.astype(np.float64),
                           batch.astype(np.float64)[:, None]], axis=1)
    size4 = np.array([size, size, size, 1.0], np.float64)
    start4 = np.concatenate([start.astype(np.float64), [0.0]])
    end4 = np.concatenate([end.astype(np.float64), [float(batch.max())]])
    num = np.floor((end4 - start4) / size4).astype(np.int64) + 1
    coord = np.floor((pos4 - start4) / size4).astype(np.int64)
    coord = np.clip(coord, 0, num - 1)
    mult = np.concatenate([[1], np.cumprod(num[:-1])])
    return (coord * mult).sum(axis=1)


def _consecutive_cluster(src):
    uniq, inv = np.unique(src, return_inverse=True)
    perm = np.zeros(uniq.shape[0], dtype=np.int64)
    perm[inv] = np.arange(inv.shape[0])       # last occurrence wins (torch CPU)
    return inv.astype(np.int64), perm


def multimodal_group_fusion(b1, b2, pool_rad):
    pos1 = np.asarray(b1["pos"], np.float32); pos2 = np.asarray(b2["pos"], np.float32)
    bt1 = np.asarray(b1["batch"], np.int32);  bt2 = np.asarray(b2["batch"], np.int32)
    x1 = np.asarray(b1["x"], np.float32);     x2 = np.asarray(b2["x"], np.float32)
    n1 = bt1.shape[0]

    pos = np.concatenate([pos1, pos2], 0)
    batch = np.concatenate([bt1, bt2], 0)
    n = pos.shape[0]

    sorted_indx = np.argsort(batch, kind="stable")
    inv_indx = np.argsort(sorted_indx, kind="stable")
    pos_s = pos[sorted_indx]
    batch_s = batch[sorted_indx]

    start = pos_s.min(axis=0) - pool_rad * 0.5
    end = pos_s.max(axis=0) + pool_rad * 0.5
    vox = _voxel_grid_cluster(pos_s, batch_s, pool_rad, start, end)
    cluster, perm = _consecutive_cluster(vox)
    n_sp = perm.shape[0]

    n_pad = _bucket(n)
    m_pad = _bucket(n_sp)

    # device-resident padded positions (pos is shipped host->device once here);
    # column 3 is a ones count column so segment counts come out of the MXU.
    pos_pad = np.zeros((n_pad, 4), np.float32)
    pos_pad[:n, :3] = pos_s
    pos_pad[:n, 3] = 1.0
    pos_pad_dev = jnp.asarray(pos_pad)
    pos_t_dev = jnp.transpose(pos_pad_dev)            # (4, n_pad), built on device

    # per-voxel mean position (superpoints) -- tiled one-hot matmul kernel
    cl1 = np.full((1, n_pad), m_pad, np.int32); cl1[0, :n] = cluster
    spt_pad_dev = segment_mean_padded(pos_pad_dev, jnp.asarray(cl1), m_pad=m_pad,
                                      splits=(4, 4), cnt_cols=(3, 3, 3),
                                      inits=(0.0, 0.0, 0.0))
    new_batch = batch_s[perm]                          # batch id of each superpoint

    # nearest superpoint of the same batch -- tiled online-argmin kernel;
    # the superpoints stay device-resident (column 3 of spt_pad_dev is ignored).
    pb = np.full((1, n_pad), -1, np.int32); pb[0, :n] = batch_s
    sb = np.full((m_pad, 1), -2, np.int32); sb[:n_sp, 0] = new_batch
    idx_pad = nearest_padded(pos_t_dev, spt_pad_dev, jnp.asarray(pb),
                             jnp.asarray(sb), dims=3)
    cluster_nn = np.asarray(idx_pad)[0, :n].astype(np.int64)
    assert np.all(new_batch[cluster_nn] == batch_s)    # batch consistency

    cluster2, perm2 = _consecutive_cluster(cluster_nn)
    n_vox = perm2.shape[0]
    v_pad = _bucket(n_vox)

    # FUSED final scatter-mean: ONE one-hot matmul pass handles
    #   * the per-cluster mean position (init 0, divided by the total count),
    #   * branch-1 feature mean (ones-init, divided by the branch-1 count),
    #   * branch-2 feature mean (ones-init, divided by the branch-2 count),
    # all in the ORIGINAL point order (mean is order-invariant, so the
    # position result equals scatter(pos_s, cluster2, 'mean')).
    cluster_orig = cluster2[inv_indx]
    c1, c2 = x1.shape[1], x2.shape[1]
    ctot = 3 + c1 + c2 + 3
    comb = np.zeros((n_pad, ctot), np.float32)
    comb[:n, 0:3] = pos                                # positions, original order
    comb[:n1, 3:3 + c1] = x1
    comb[n1:n, 3 + c1:3 + c1 + c2] = x2
    comb[:n, 3 + c1 + c2] = 1.0                        # total count
    comb[:n1, 3 + c1 + c2 + 1] = 1.0                   # branch-1 count
    comb[n1:n, 3 + c1 + c2 + 2] = 1.0                  # branch-2 count
    clo = np.full((1, n_pad), v_pad, np.int32); clo[0, :n] = cluster_orig
    fused = segment_mean_padded(
        jnp.asarray(comb), jnp.asarray(clo), m_pad=v_pad,
        splits=(3, 3 + c1),
        cnt_cols=(3 + c1 + c2, 3 + c1 + c2 + 1, 3 + c1 + c2 + 2),
        inits=(0.0, 1.0, 1.0))

    pos_out = fused[:n_vox, 0:3]
    x_out = fused[:n_vox, 3:3 + c1 + c2]
    batch_out = jnp.asarray(batch_s[perm2])
    return x_out, pos_out, batch_out


# ----------------------- pure-numpy end-to-end reference ---------------------
def _reference_fusion(b1, b2, pool_rad):
    pos1 = np.asarray(b1["pos"], np.float32); pos2 = np.asarray(b2["pos"], np.float32)
    bt1 = np.asarray(b1["batch"], np.int64);  bt2 = np.asarray(b2["batch"], np.int64)
    x1 = np.asarray(b1["x"], np.float32);     x2 = np.asarray(b2["x"], np.float32)
    n1 = bt1.shape[0]
    pos = np.concatenate([pos1, pos2], 0); batch = np.concatenate([bt1, bt2], 0)
    sorted_indx = np.argsort(batch, kind="stable")
    inv_indx = np.argsort(sorted_indx, kind="stable")
    pos_s = pos[sorted_indx]; batch_s = batch[sorted_indx]
    start = pos_s.min(0) - pool_rad * 0.5; end = pos_s.max(0) + pool_rad * 0.5
    vox = _voxel_grid_cluster(pos_s, batch_s, pool_rad, start, end)
    cluster, perm = _consecutive_cluster(vox)
    n_sp = perm.shape[0]

    def seg_mean(vals, idx, m, init=0.0):
        out = np.full((m, vals.shape[1]), init, np.float64)
        np.add.at(out, idx, vals.astype(np.float64))
        cnt = np.maximum(np.bincount(idx, minlength=m), 1).astype(np.float64)
        return out / cnt[:, None]

    superpoint = seg_mean(pos_s, cluster, n_sp)
    new_batch = batch_s[perm]
    d = ((pos_s[:, None, :].astype(np.float32)
          - superpoint[None, :, :].astype(np.float32)) ** 2).sum(-1)
    d[batch_s[:, None] != new_batch[None, :]] = np.inf
    cluster_nn = d.argmin(1)
    cluster2, perm2 = _consecutive_cluster(cluster_nn)
    n_vox = perm2.shape[0]
    pos_out = seg_mean(pos_s, cluster2, n_vox)
    cluster_orig = cluster2[inv_indx]
    xb1 = seg_mean(x1, cluster_orig[:n1], n_vox, init=1.0)
    xb2 = seg_mean(x2, cluster_orig[n1:], n_vox, init=1.0)
    x_out = np.concatenate([xb1, xb2], 1)
    batch_out = batch_s[perm2]
    return x_out.astype(np.float32), pos_out.astype(np.float32), batch_out


if __name__ == "__main__":
    POOL_RAD = 0.45                            # the module's only "parameter"
    N1, N2, C1, C2 = 20, 24, 8, 6              # small synthetic point clouds

    key = jax.random.PRNGKey(0)
    k1, k2, k3, k4 = jax.random.split(key, 4)
    b1 = dict(
        pos=jax.random.uniform(k1, (N1, 3), jnp.float32),
        x=jax.random.normal(k2, (N1, C1), jnp.float32),
        batch=jnp.concatenate([jnp.zeros((N1 // 2,), jnp.int32),
                               jnp.ones((N1 - N1 // 2,), jnp.int32)]),
    )
    b2 = dict(
        pos=jax.random.uniform(k3, (N2, 3), jnp.float32),
        x=jax.random.normal(k4, (N2, C2), jnp.float32),
        batch=jnp.concatenate([jnp.zeros((N2 // 2,), jnp.int32),
                               jnp.ones((N2 - N2 // 2,), jnp.int32)]),
    )

    x_out, pos_out, batch_out = multimodal_group_fusion(b1, b2, POOL_RAD)
    jax.block_until_ready((x_out, pos_out, batch_out))

    # shape / consistency checks
    assert x_out.shape[1] == C1 + C2
    assert x_out.shape[0] == pos_out.shape[0] == batch_out.shape[0]
    assert pos_out.shape[1] == 3

    # end-to-end numpy reference check (same host glue, numpy scatter/nearest)
    x_ref, p_ref, b_ref = _reference_fusion(b1, b2, POOL_RAD)
    assert x_ref.shape == tuple(x_out.shape)
    assert np.allclose(np.asarray(x_out), x_ref, atol=1e-4)
    assert np.allclose(np.asarray(pos_out), p_ref, atol=1e-4)
    assert np.array_equal(np.asarray(batch_out).astype(np.int64),
                          b_ref.astype(np.int64))

    # cross-check the tiled segment-mean kernel (incl. the ones-init quirk)
    cl_chk = np.array([0, 2, 2, 1, 0, 1, 3], np.int64)
    x_chk = np.asarray(jax.random.normal(jax.random.PRNGKey(1), (7, 5), jnp.float32))
    got = segment_mean_host(x_chk, cl_chk, 4, init=1.0)
    ref = np.ones((4, 5), np.float32)
    np.add.at(ref, cl_chk, x_chk)
    cnt = np.maximum(np.bincount(cl_chk, minlength=4), 1).astype(np.float32)
    ref = ref / cnt[:, None]
    assert np.allclose(got, ref, atol=1e-4)

    # cross-check the tiled nearest kernel against a brute-force reference
    kp, ks = jax.random.split(jax.random.PRNGKey(2))
    P = np.asarray(jax.random.uniform(kp, (37, 3), jnp.float32))
    S = np.asarray(jax.random.uniform(ks, (11, 3), jnp.float32))
    pbt = np.array([0] * 20 + [1] * 17, np.int32)
    sbt = np.array([0] * 6 + [1] * 5, np.int32)
    got_idx = nearest_host(P, S, pbt, sbt)
    dref = ((P[:, None, :].astype(np.float64)
             - S[None, :, :].astype(np.float64)) ** 2).sum(-1)
    dref[pbt[:, None] != sbt[None, :]] = np.inf
    assert np.all(sbt[got_idx] == pbt)
    chosen = dref[np.arange(P.shape[0]), got_idx]
    assert np.allclose(chosen, dref.min(axis=1), rtol=1e-4, atol=1e-5)

    print("KERNEL_OK")
</pallas_src>

<mosaic_0001>
module attributes {stable_mosaic.version = 11 : i64} {
  func.func @_segment_mean_kernel(%arg0: i32, %arg1: i32, %arg2: memref<512x4xf32, #tpu.memory_space<vmem>>, %arg3: memref<1x512xi32, #tpu.memory_space<vmem>>, %arg4: memref<512x4xf32, #tpu.memory_space<vmem>>) attributes {dimension_semantics = [#tpu.dimension_semantics<parallel>, #tpu.dimension_semantics<arbitrary>], iteration_bounds = array<i64: 1, 1>, scalar_prefetch = 0 : i64, scratch_operands = 0 : i64, tpu.core_type = #tpu.core_type<tc>, window_params = [{transform_indices = @transform_0, window_bounds = array<i64: 512, 4>}, {transform_indices = @transform_1, window_bounds = array<i64: 1, 512>}, {transform_indices = @transform_2, window_bounds = array<i64: 512, 4>}]} {
    %c0_i32 = arith.constant 0 : i32
    %0 = arith.cmpi eq, %arg1, %c0_i32 : i32
    %1 = arith.extui %0 : i1 to i32
    %c0_i32_0 = arith.constant 0 : i32
    %2 = arith.cmpi ne, %1, %c0_i32_0 : i32
    scf.if %2 {
      %cst_10 = arith.constant 0.000000e+00 : f32
      %20 = vector.broadcast %cst_10 : f32 to vector<512x4xf32>
      %c0_11 = arith.constant 0 : index
      %c0_12 = arith.constant 0 : index
      %21 = vector.load %arg4[%c0_11, %c0_12] : memref<512x4xf32, #tpu.memory_space<vmem>>, vector<512x4xf32>
      tpu.vector_store %arg4[%c0_11, %c0_12], %20 {strides = array<i32>} : memref<512x4xf32, #tpu.memory_space<vmem>>, vector<512x4xf32>,
    } else {
    }
    %c0 = arith.constant 0 : index
    %c0_1 = arith.constant 0 : index
    %3 = vector.load %arg2[%c0, %c0_1] : memref<512x4xf32, #tpu.memory_space<vmem>>, vector<512x4xf32>
    %c0_2 = arith.constant 0 : index
    %c0_3 = arith.constant 0 : index
    %4 = vector.load %arg3[%c0_2, %c0_3] : memref<1x512xi32, #tpu.memory_space<vmem>>, vector<1x512xi32>
    %5 = tpu.iota {dimensions = array<i32: 0>} : vector<512x512xi32>
    %c512_i32 = arith.constant 512 : i32
    %6 = arith.muli %arg0, %c512_i32 : i32
    %7 = vector.broadcast %6 : i32 to vector<512x512xi32>
    %8 = arith.addi %5, %7 : vector<512x512xi32>
    %9 = vector.broadcast %4 : vector<1x512xi32> to vector<512x512xi32>
    %10 = arith.cmpi eq, %8, %9 : vector<512x512xi32>
    %11 = arith.extui %10 : vector<512x512xi1> to vector<512x512xi32>
    %12 = arith.sitofp %11 : vector<512x512xi32> to vector<512x512xf32>
    %c0_4 = arith.constant 0 : index
    %c0_5 = arith.constant 0 : index
    %13 = vector.load %arg4[%c0_4, %c0_5] : memref<512x4xf32, #tpu.memory_space<vmem>>, vector<512x4xf32>
    %cst = arith.constant dense<0.000000e+00> : vector<512x4xf32>
    %14 = tpu.matmul %12, %3, %cst {dimension_numbers = #tpu.dot_dimension_numbers<[1], [0], [0], [1], [0, 0, 1, 1], [], []>} : vector<512x512xf32>, vector<512x4xf32>, vector<512x4xf32> -> vector<512x4xf32>
    %15 = arith.addf %13, %14 : vector<512x4xf32>
    %c0_6 = arith.constant 0 : index
    %c0_7 = arith.constant 0 : index
    %16 = vector.load %arg4[%c0_6, %c0_7] : memref<512x4xf32, #tpu.memory_space<vmem>>, vector<512x4xf32>
    tpu.vector_store %arg4[%c0_6, %c0_7], %15 {strides = array<i32>} : memref<512x4xf32, #tpu.memory_space<vmem>>, vector<512x4xf32>,
    %c0_i32_8 = arith.constant 0 : i32
    %17 = arith.cmpi eq, %arg1, %c0_i32_8 : i32
    %18 = arith.extui %17 : i1 to i32
    %c0_i32_9 = arith.constant 0 : i32
    %19 = arith.cmpi ne, %18, %c0_i32_9 : i32
    scf.if %19 {
      %c0_10 = arith.constant 0 : index
      %c0_11 = arith.constant 0 : index
      %20 = vector.load %arg4[%c0_10, %c0_11] : memref<512x4xf32, #tpu.memory_space<vmem>>, vector<512x4xf32>
      %21 = vector.extract_strided_slice %20 {offsets = [0, 3], sizes = [512, 1], strides = [1, 1]} : vector<512x4xf32> to vector<512x1xf32>
      %cst_12 = arith.constant 1.000000e+00 : f32
      %22 = vector.broadcast %cst_12 : f32 to vector<512x1xf32>
      %23 = arith.maximumf %21, %22 : vector<512x1xf32>
      %24 = vector.extract_strided_slice %20 {offsets = [0, 3], sizes = [512, 1], strides = [1, 1]} : vector<512x4xf32> to vector<512x1xf32>
      %cst_13 = arith.constant 1.000000e+00 : f32
      %25 = vector.broadcast %cst_13 : f32 to vector<512x1xf32>
      %26 = arith.maximumf %24, %25 : vector<512x1xf32>
      %27 = vector.extract_strided_slice %20 {offsets = [0, 3], sizes = [512, 1], strides = [1, 1]} : vector<512x4xf32> to vector<512x1xf32>
      %cst_14 = arith.constant 1.000000e+00 : f32
      %28 = vector.broadcast %cst_14 : f32 to vector<512x1xf32>
      %29 = arith.maximumf %27, %28 : vector<512x1xf32>
      %30 = tpu.iota {dimensions = array<i32: 1>} : vector<512x4xi32>
      %c4_i32 = arith.constant 4 : i32
      %31 = vector.broadcast %c4_i32 : i32 to vector<512x4xi32>
      %32 = arith.cmpi slt, %30, %31 : vector<512x4xi32>
      %c4_i32_15 = arith.constant 4 : i32
      %33 = vector.broadcast %c4_i32_15 : i32 to vector<512x4xi32>
      %34 = arith.cmpi slt, %30, %33 : vector<512x4xi32>
      %35 = vector.shape_cast %26 : vector<512x1xf32> to vector<512x1xf32>
      %36 = vector.broadcast %35 : vector<512x1xf32> to vector<512x4xf32>
      %37 = vector.shape_cast %29 : vector<512x1xf32> to vector<512x1xf32>
      %38 = vector.broadcast %37 : vector<512x1xf32> to vector<512x4xf32>
      %39 = arith.select %34, %36, %38 : vector<512x4xi1>, vector<512x4xf32>
      %40 = vector.shape_cast %23 : vector<512x1xf32> to vector<512x1xf32>
      %41 = vector.broadcast %40 : vector<512x1xf32> to vector<512x4xf32>
      %42 = arith.select %32, %41, %39 : vector<512x4xi1>, vector<512x4xf32>
      %c4_i32_16 = arith.constant 4 : i32
      %43 = vector.broadcast %c4_i32_16 : i32 to vector<512x4xi32>
      %44 = arith.cmpi slt, %30, %43 : vector<512x4xi32>
      %c4_i32_17 = arith.constant 4 : i32
      %45 = vector.broadcast %c4_i32_17 : i32 to vector<512x4xi32>
      %46 = arith.cmpi slt, %30, %45 : vector<512x4xi32>
      %cst_18 = arith.constant 0.000000e+00 : f32
      %cst_19 = arith.constant 0.000000e+00 : f32
      %47 = vector.broadcast %cst_18 : f32 to vector<512x4xf32>
      %48 = vector.broadcast %cst_19 : f32 to vector<512x4xf32>
      %49 = arith.select %46, %47, %48 : vector<512x4xi1>, vector<512x4xf32>
      %cst_20 = arith.constant 0.000000e+00 : f32
      %50 = vector.broadcast %cst_20 : f32 to vector<512x4xf32>
      %51 = arith.select %44, %50, %49 : vector<512x4xi1>, vector<512x4xf32>
      %52 = arith.addf %51, %20 : vector<512x4xf32>
      %53 = arith.divf %52, %42 : vector<512x4xf32>
      %c0_21 = arith.constant 0 : index
      %c0_22 = arith.constant 0 : index
      %54 = vector.load %arg4[%c0_21, %c0_22] : memref<512x4xf32, #tpu.memory_space<vmem>>, vector<512x4xf32>
      tpu.vector_store %arg4[%c0_21, %c0_22], %53 {strides = array<i32>} : memref<512x4xf32, #tpu.memory_space<vmem>>, vector<512x4xf32>,
    } else {
    }
    return
  }
  func.func @transform_0(%arg0: i32, %arg1: i32) -> (i32, i32) {
    %c0_i32 = arith.constant 0 : i32
    %c0_i32_0 = arith.constant 0 : i32
    return %arg1, %c0_i32 : i32, i32
  }
  func.func @transform_1(%arg0: i32, %arg1: i32) -> (i32, i32) {
    %c0_i32 = arith.constant 0 : i32
    %c0_i32_0 = arith.constant 0 : i32
    return %c0_i32, %arg1 : i32, i32
  }
  func.func @transform_2(%arg0: i32, %arg1: i32) -> (i32, i32) {
    %c0_i32 = arith.constant 0 : i32
    %c0_i32_0 = arith.constant 0 : i32
    return %arg0, %c0_i32 : i32, i32
  }
}

</mosaic_0001>

<llo_original>
// kernel: segment_mean_padded.1
$region0: #{segment_mean_padded.1}
  #allocation0 [shape = 'u32[]', space=smem, size = 0x4, offset = 0x4, fixed_abs, tag = 'smem constant byte address 0x4 - core index']
  #allocation1 [shape = 'u32[144,128]{1,0:T(1,128)}', space=vmem, size = 0x12000, scoped, tag = 'internal scratch']
  %s0 = inlined_call_operand.vmem [shape: f32[512,4], index: 0, kind: input, shape index: {}]
  %s1 = inlined_call_operand.vmem [shape: s32[1,512], index: 1, kind: input, shape index: {}]
  %s2 = inlined_call_operand.vmem [shape: f32[512,4], index: 2, kind: output, shape index: {}]
  %s3 = sld [smem:[#allocation0]]
  $region26: #{segment_mean_padded.1} parent=0
    _
  %s5 = ssub.s32 1, %s3
  %s6 = scalar_select 0, %s5, %s3
  // Predicated region
  $region2: #{segment_mean_padded.1} parent=0 // pred_check
    _
  $region3: #{segment_mean_padded.1} parent=0 // pred_check_branch
    %8 = sbr.rel (0) target = $region5
  $region4: #{segment_mean_padded.1} parent=0 // pred_region
    _
  $region5: #{segment_mean_padded.1} parent=0 // pred_fallthru
    _
  // Predicated region
  $region6: #{segment_mean_padded.1} parent=0 // pred_check
    _
  $region7: #{segment_mean_padded.1} parent=0 // pred_check_branch
    %10 = sbr.rel (0) target = $region9
  $region8: #{segment_mean_padded.1} parent=0 // pred_region
    _
  $region9: #{segment_mean_padded.1} parent=0 // pred_fallthru
    _
  %p11 = scmp.eq.s32.totalorder 0, 0
  // Predicated region
  $region10: #{segment_mean_padded.1} parent=0 // pred_check
    %p12 = pneg %p11
  $region11: #{segment_mean_padded.1} parent=0 // pred_check_branch
    %14 = sbr.rel (%p12) target = $region13
  $region12: #{segment_mean_padded.1} parent=0 // pred_region
    %vm15 = vcmask 31744
    %16 = vst.msk [vmem:[%s2] sm:$0xff] %vm15, 0.0
    %17 = vst.msk [vmem:[%s2 + $0x8] sm:$0xff] %vm15, 0.0
    %18 = vst.msk [vmem:[%s2 + $0x10] sm:$0xff] %vm15, 0.0
    %19 = vst.msk [vmem:[%s2 + $0x18] sm:$0xff] %vm15, 0.0
    %20 = vst.msk [vmem:[%s2 + $0x20] sm:$0xff] %vm15, 0.0
    %21 = vst.msk [vmem:[%s2 + $0x28] sm:$0xff] %vm15, 0.0
    %22 = vst.msk [vmem:[%s2 + $0x30] sm:$0xff] %vm15, 0.0
    %23 = vst.msk [vmem:[%s2 + $0x38] sm:$0xff] %vm15, 0.0
    %24 = vst.msk [vmem:[%s2 + $0x40] sm:$0xff] %vm15, 0.0
    %25 = vst.msk [vmem:[%s2 + $0x48] sm:$0xff] %vm15, 0.0
    %26 = vst.msk [vmem:[%s2 + $0x50] sm:$0xff] %vm15, 0.0
    %27 = vst.msk [vmem:[%s2 + $0x58] sm:$0xff] %vm15, 0.0
    %28 = vst.msk [vmem:[%s2 + $0x60] sm:$0xff] %vm15, 0.0
    %29 = vst.msk [vmem:[%s2 + $0x68] sm:$0xff] %vm15, 0.0
    %30 = vst.msk [vmem:[%s2 + $0x70] sm:$0xff] %vm15, 0.0
    %31 = vst.msk [vmem:[%s2 + $0x78] sm:$0xff] %vm15, 0.0
    %32 = vst.msk [vmem:[%s2 + $0x80] sm:$0xff] %vm15, 0.0
    %33 = vst.msk [vmem:[%s2 + $0x88] sm:$0xff] %vm15, 0.0
    %34 = vst.msk [vmem:[%s2 + $0x90] sm:$0xff] %vm15, 0.0
    %35 = vst.msk [vmem:[%s2 + $0x98] sm:$0xff] %vm15, 0.0
    %36 = vst.msk [vmem:[%s2 + $0xa0] sm:$0xff] %vm15, 0.0
    %37 = vst.msk [vmem:[%s2 + $0xa8] sm:$0xff] %vm15, 0.0
    %38 = vst.msk [vmem:[%s2 + $0xb0] sm:$0xff] %vm15, 0.0
    %39 = vst.msk [vmem:[%s2 + $0xb8] sm:$0xff] %vm15, 0.0
    %40 = vst.msk [vmem:[%s2 + $0xc0] sm:$0xff] %vm15, 0.0
    %41 = vst.msk [vmem:[%s2 + $0xc8] sm:$0xff] %vm15, 0.0
    %42 = vst.msk [vmem:[%s2 + $0xd0] sm:$0xff] %vm15, 0.0
    %43 = vst.msk [vmem:[%s2 + $0xd8] sm:$0xff] %vm15, 0.0
    %44 = vst.msk [vmem:[%s2 + $0xe0] sm:$0xff] %vm15, 0.0
    %45 = vst.msk [vmem:[%s2 + $0xe8] sm:$0xff] %vm15, 0.0
    %46 = vst.msk [vmem:[%s2 + $0xf0] sm:$0xff] %vm15, 0.0
    %47 = vst.msk [vmem:[%s2 + $0xf8] sm:$0xff] %vm15, 0.0
    %48 = vst.msk [vmem:[%s2 + $0x100] sm:$0xff] %vm15, 0.0
    %49 = vst.msk [vmem:[%s2 + $0x108] sm:$0xff] %vm15, 0.0
    %50 = vst.msk [vmem:[%s2 + $0x110] sm:$0xff] %vm15, 0.0
    %51 = vst.msk [vmem:[%s2 + $0x118] sm:$0xff] %vm15, 0.0
    %52 = vst.msk [vmem:[%s2 + $0x120] sm:$0xff] %vm15, 0.0
    %53 = vst.msk [vmem:[%s2 + $0x128] sm:$0xff] %vm15, 0.0
    %54 = vst.msk [vmem:[%s2 + $0x130] sm:$0xff] %vm15, 0.0
    %55 = vst.msk [vmem:[%s2 + $0x138] sm:$0xff] %vm15, 0.0
    %56 = vst.msk [vmem:[%s2 + $0x140] sm:$0xff] %vm15, 0.0
    %57 = vst.msk [vmem:[%s2 + $0x148] sm:$0xff] %vm15, 0.0
    %58 = vst.msk [vmem:[%s2 + $0x150] sm:$0xff] %vm15, 0.0
    %59 = vst.msk [vmem:[%s2 + $0x158] sm:$0xff] %vm15, 0.0
    %60 = vst.msk [vmem:[%s2 + $0x160] sm:$0xff] %vm15, 0.0
    %61 = vst.msk [vmem:[%s2 + $0x168] sm:$0xff] %vm15, 0.0
    %62 = vst.msk [vmem:[%s2 + $0x170] sm:$0xff] %vm15, 0.0
    %63 = vst.msk [vmem:[%s2 + $0x178] sm:$0xff] %vm15, 0.0
    %64 = vst.msk [vmem:[%s2 + $0x180] sm:$0xff] %vm15, 0.0
    %65 = vst.msk [vmem:[%s2 + $0x188] sm:$0xff] %vm15, 0.0
    %66 = vst.msk [vmem:[%s2 + $0x190] sm:$0xff] %vm15, 0.0
    %67 = vst.msk [vmem:[%s2 + $0x198] sm:$0xff] %vm15, 0.0
    %68 = vst.msk [vmem:[%s2 + $0x1a0] sm:$0xff] %vm15, 0.0
    %69 = vst.msk [vmem:[%s2 + $0x1a8] sm:$0xff] %vm15, 0.0
    %70 = vst.msk [vmem:[%s2 + $0x1b0] sm:$0xff] %vm15, 0.0
    %71 = vst.msk [vmem:[%s2 + $0x1b8] sm:$0xff] %vm15, 0.0
    %72 = vst.msk [vmem:[%s2 + $0x1c0] sm:$0xff] %vm15, 0.0
    %73 = vst.msk [vmem:[%s2 + $0x1c8] sm:$0xff] %vm15, 0.0
    %74 = vst.msk [vmem:[%s2 + $0x1d0] sm:$0xff] %vm15, 0.0
    %75 = vst.msk [vmem:[%s2 + $0x1d8] sm:$0xff] %vm15, 0.0
    %76 = vst.msk [vmem:[%s2 + $0x1e0] sm:$0xff] %vm15, 0.0
    %77 = vst.msk [vmem:[%s2 + $0x1e8] sm:$0xff] %vm15, 0.0
    %78 = vst.msk [vmem:[%s2 + $0x1f0] sm:$0xff] %vm15, 0.0
    %79 = vst.msk [vmem:[%s2 + $0x1f8] sm:$0xff] %vm15, 0.0
  $region13: #{segment_mean_padded.1} parent=0 // pred_fallthru
    _
  %v80 = vld [vmem:[%s0] sm:$0xff]
  %v81 = vld [vmem:[%s0 + $0x8] sm:$0xff]
  %v82 = vld [vmem:[%s0 + $0x10] sm:$0xff]
  %v83 = vld [vmem:[%s0 + $0x18] sm:$0xff]
  %v84 = vld [vmem:[%s0 + $0x20] sm:$0xff]
  %v85 = vld [vmem:[%s0 + $0x28] sm:$0xff]
  %v86 = vld [vmem:[%s0 + $0x30] sm:$0xff]
  %v87 = vld [vmem:[%s0 + $0x38] sm:$0xff]
  %v88 = vld [vmem:[%s0 + $0x40] sm:$0xff]
  %v89 = vld [vmem:[%s0 + $0x48] sm:$0xff]
  %v90 = vld [vmem:[%s0 + $0x50] sm:$0xff]
  %v91 = vld [vmem:[%s0 + $0x58] sm:$0xff]
  %v92 = vld [vmem:[%s0 + $0x60] sm:$0xff]
  %v93 = vld [vmem:[%s0 + $0x68] sm:$0xff]
  %v94 = vld [vmem:[%s0 + $0x70] sm:$0xff]
  %v95 = vld [vmem:[%s0 + $0x78] sm:$0xff]
  %v96 = vld [vmem:[%s0 + $0x80] sm:$0xff]
  %v97 = vld [vmem:[%s0 + $0x88] sm:$0xff]
  %v98 = vld [vmem:[%s0 + $0x90] sm:$0xff]
  %v99 = vld [vmem:[%s0 + $0x98] sm:$0xff]
  %v100 = vld [vmem:[%s0 + $0xa0] sm:$0xff]
  %v101 = vld [vmem:[%s0 + $0xa8] sm:$0xff]
  %v102 = vld [vmem:[%s0 + $0xb0] sm:$0xff]
  %v103 = vld [vmem:[%s0 + $0xb8] sm:$0xff]
  %v104 = vld [vmem:[%s0 + $0xc0] sm:$0xff]
  %v105 = vld [vmem:[%s0 + $0xc8] sm:$0xff]
  %v106 = vld [vmem:[%s0 + $0xd0] sm:$0xff]
  %v107 = vld [vmem:[%s0 + $0xd8] sm:$0xff]
  %v108 = vld [vmem:[%s0 + $0xe0] sm:$0xff]
  %v109 = vld [vmem:[%s0 + $0xe8] sm:$0xff]
  %v110 = vld [vmem:[%s0 + $0xf0] sm:$0xff]
  %v111 = vld [vmem:[%s0 + $0xf8] sm:$0xff]
  %v112 = vld [vmem:[%s0 + $0x100] sm:$0xff]
  %v113 = vld [vmem:[%s0 + $0x108] sm:$0xff]
  %v114 = vld [vmem:[%s0 + $0x110] sm:$0xff]
  %v115 = vld [vmem:[%s0 + $0x118] sm:$0xff]
  %v116 = vld [vmem:[%s0 + $0x120] sm:$0xff]
  %v117 = vld [vmem:[%s0 + $0x128] sm:$0xff]
  %v118 = vld [vmem:[%s0 + $0x130] sm:$0xff]
  %v119 = vld [vmem:[%s0 + $0x138] sm:$0xff]
  %v120 = vld [vmem:[%s0 + $0x140] sm:$0xff]
  %v121 = vld [vmem:[%s0 + $0x148] sm:$0xff]
  %v122 = vld [vmem:[%s0 + $0x150] sm:$0xff]
  %v123 = vld [vmem:[%s0 + $0x158] sm:$0xff]
  %v124 = vld [vmem:[%s0 + $0x160] sm:$0xff]
  %v125 = vld [vmem:[%s0 + $0x168] sm:$0xff]
  %v126 = vld [vmem:[%s0 + $0x170] sm:$0xff]
  %v127 = vld [vmem:[%s0 + $0x178] sm:$0xff]
  %v128 = vld [vmem:[%s0 + $0x180] sm:$0xff]
  %v129 = vld [vmem:[%s0 + $0x188] sm:$0xff]
  %v130 = vld [vmem:[%s0 + $0x190] sm:$0xff]
  %v131 = vld [vmem:[%s0 + $0x198] sm:$0xff]
  %v132 = vld [vmem:[%s0 + $0x1a0] sm:$0xff]
  %v133 = vld [vmem:[%s0 + $0x1a8] sm:$0xff]
  %v134 = vld [vmem:[%s0 + $0x1b0] sm:$0xff]
  %v135 = vld [vmem:[%s0 + $0x1b8] sm:$0xff]
  %v136 = vld [vmem:[%s0 + $0x1c0] sm:$0xff]
  %v137 = vld [vmem:[%s0 + $0x1c8] sm:$0xff]
  %v138 = vld [vmem:[%s0 + $0x1d0] sm:$0xff]
  %v139 = vld [vmem:[%s0 + $0x1d8] sm:$0xff]
  %v140 = vld [vmem:[%s0 + $0x1e0] sm:$0xff]
  %v141 = vld [vmem:[%s0 + $0x1e8] sm:$0xff]
  %v142 = vld [vmem:[%s0 + $0x1f0] sm:$0xff]
  %v143 = vld [vmem:[%s0 + $0x1f8] sm:$0xff]
  %v144 = vld [vmem:[%s1] sm:$0xf]
  %v145 = vlaneseq
  %v146 = vshrl.u32 %v145, 7
  %v147 = vadd.s32 %v146, 8
  %v148 = vadd.s32 %v146, 16
  %v149 = vadd.s32 %v146, 24
  %v150 = vadd.s32 %v146, 32
  %v151 = vadd.s32 %v146, 40
  %v152 = vadd.s32 %v146, 48
  %v153 = vadd.s32 %v146, 56
  %v154 = vadd.s32 %v146, 64
  %v155 = vadd.s32 %v146, 72
  %v156 = vadd.s32 %v146, 80
  %v157 = vadd.s32 %v146, 88
  %v158 = vadd.s32 %v146, 96
  %v159 = vadd.s32 %v146, 104
  %v160 = vadd.s32 %v146, 112
  %v161 = vadd.s32 %v146, 120
  %v162 = vadd.s32 %v146, 128
  %v163 = vadd.s32 %v146, 136
  %v164 = vadd.s32 %v146, 144
  %v165 = vadd.s32 %v146, 152
  %v166 = vadd.s32 %v146, 160
  %v167 = vadd.s32 %v146, 168
  %v168 = vadd.s32 %v146, 176
  %v169 = vadd.s32 %v146, 184
  %v170 = vadd.s32 %v146, 192
  %v171 = vadd.s32 %v146, 200
  %v172 = vadd.s32 %v146, 208
  %v173 = vadd.s32 %v146, 216
  %v174 = vadd.s32 %v146, 224
  %v175 = vadd.s32 %v146, 232
  %v176 = vadd.s32 %v146, 240
  %v177 = vadd.s32 %v146, 248
  %v178 = vadd.s32 %v146, 256
  %v179 = vadd.s32 %v146, 264
  %v180 = vadd.s32 %v146, 272
  %v181 = vadd.s32 %v146, 280
  %v182 = vadd.s32 %v146, 288
  %v183 = vadd.s32 %v146, 296
  %v184 = vadd.s32 %v146, 304
  %v185 = vadd.s32 %v146, 312
  %v186 = vadd.s32 %v146, 320
  %v187 = vadd.s32 %v146, 328
  %v188 = vadd.s32 %v146, 336
  %v189 = vadd.s32 %v146, 344
  %v190 = vadd.s32 %v146, 352
  %v191 = vadd.s32 %v146, 360
  %v192 = vadd.s32 %v146, 368
  %v193 = vadd.s32 %v146, 376
  %v194 = vadd.s32 %v146, 384
  %v195 = vadd.s32 %v146, 392
  %v196 = vadd.s32 %v146, 400
  %v197 = vadd.s32 %v146, 408
  %v198 = vadd.s32 %v146, 416
  %v199 = vadd.s32 %v146, 424
  %v200 = vadd.s32 %v146, 432
  %v201 = vadd.s32 %v146, 440
  %v202 = vadd.s32 %v146, 448
  %v203 = vadd.s32 %v146, 456
  %v204 = vadd.s32 %v146, 464
  %v205 = vadd.s32 %v146, 472
  %v206 = vadd.s32 %v146, 480
  %v207 = vadd.s32 %v146, 488
  %v208 = vadd.s32 %v146, 496
  %v209 = vadd.s32 %v146, 504
  %s210 = smul.u32 0, 512
  %v211 = vstv %s210
  %v212 = vadd.s32 %v146, %v211
  %v213 = vadd.s32 %v147, %v211
  %v214 = vadd.s32 %v148, %v211
  %v215 = vadd.s32 %v149, %v211
  %v216 = vadd.s32 %v150, %v211
  %v217 = vadd.s32 %v151, %v211
  %v218 = vadd.s32 %v152, %v211
  %v219 = vadd.s32 %v153, %v211
  %v220 = vadd.s32 %v154, %v211
  %v221 = vadd.s32 %v155, %v211
  %v222 = vadd.s32 %v156, %v211
  %v223 = vadd.s32 %v157, %v211
  %v224 = vadd.s32 %v158, %v211
  %v225 = vadd.s32 %v159, %v211
  %v226 = vadd.s32 %v160, %v211
  %v227 = vadd.s32 %v161, %v211
  %v228 = vadd.s32 %v162, %v211
  %v229 = vadd.s32 %v163, %v211
  %v230 = vadd.s32 %v164, %v211
  %v231 = vadd.s32 %v165, %v211
  %v232 = vadd.s32 %v166, %v211
  %v233 = vadd.s32 %v167, %v211
  %v234 = vadd.s32 %v168, %v211
  %v235 = vadd.s32 %v169, %v211
  %v236 = vadd.s32 %v170, %v211
  %v237 = vadd.s32 %v171, %v211
  %v238 = vadd.s32 %v172, %v211
  %v239 = vadd.s32 %v173, %v211
  %v240 = vadd.s32 %v174, %v211
  %v241 = vadd.s32 %v175, %v211
  %v242 = vadd.s32 %v176, %v211
  %v243 = vadd.s32 %v177, %v211
  %v244 = vadd.s32 %v178, %v211
  %v245 = vadd.s32 %v179, %v211
  %v246 = vadd.s32 %v180, %v211
  %v247 = vadd.s32 %v181, %v211
  %v248 = vadd.s32 %v182, %v211
  %v249 = vadd.s32 %v183, %v211
  %v250 = vadd.s32 %v184, %v211
  %v251 = vadd.s32 %v185, %v211
  %v252 = vadd.s32 %v186, %v211
  %v253 = vadd.s32 %v187, %v211
  %v254 = vadd.s32 %v188, %v211
  %v255 = vadd.s32 %v189, %v211
  %v256 = vadd.s32 %v190, %v211
  %v257 = vadd.s32 %v191, %v211
  %v258 = vadd.s32 %v192, %v211
  %v259 = vadd.s32 %v193, %v211
  %v260 = vadd.s32 %v194, %v211
  %v261 = vadd.s32 %v195, %v211
  %v262 = vadd.s32 %v196, %v211
  %v263 = vadd.s32 %v197, %v211
  %v264 = vadd.s32 %v198, %v211
  %v265 = vadd.s32 %v199, %v211
  %v266 = vadd.s32 %v200, %v211
  %v267 = vadd.s32 %v201, %v211
  %v268 = vadd.s32 %v202, %v211
  %v269 = vadd.s32 %v203, %v211
  %v270 = vadd.s32 %v204, %v211
  %v271 = vadd.s32 %v205, %v211
  %v272 = vadd.s32 %v206, %v211
  %v273 = vadd.s32 %v207, %v211
  %v274 = vadd.s32 %v208, %v211
  %v275 = vadd.s32 %v209, %v211
  %v276 = vlaneseq
  %v277 = vshrl.u32 %v276, 7
  %v278 = vsub.s32 0, %v277
  %v279 = vrot.slane %v144, %v278
  %v280 = vlaneseq
  %v281 = vshrl.u32 %v280, 7
  %v282 = vsub.s32 1, %v281
  %v283 = vrot.slane %v144, %v282
  %v284 = vlaneseq
  %v285 = vshrl.u32 %v284, 7
  %v286 = vsub.s32 2, %v285
  %v287 = vrot.slane %v144, %v286
  %v288 = vlaneseq
  %v289 = vshrl.u32 %v288, 7
  %v290 = vsub.s32 3, %v289
  %v291 = vrot.slane %v144, %v290
  %vm292 = vcmp.eq.s32.totalorder %v212, %v279
  %vm293 = vcmp.eq.s32.totalorder %v212, %v283
  %vm294 = vcmp.eq.s32.totalorder %v212, %v287
  %vm295 = vcmp.eq.s32.totalorder %v212, %v291
  %vm296 = vcmp.eq.s32.totalorder %v213, %v279
  %vm297 = vcmp.eq.s32.totalorder %v213, %v283
  %vm298 = vcmp.eq.s32.totalorder %v213, %v287
  %vm299 = vcmp.eq.s32.totalorder %v213, %v291
  %vm300 = vcmp.eq.s32.totalorder %v214, %v279
  %vm301 = vcmp.eq.s32.totalorder %v214, %v283
  %vm302 = vcmp.eq.s32.totalorder %v214, %v287
  %vm303 = vcmp.eq.s32.totalorder %v214, %v291
  %vm304 = vcmp.eq.s32.totalorder %v215, %v279
  %vm305 = vcmp.eq.s32.totalorder %v215, %v283
  %vm306 = vcmp.eq.s32.totalorder %v215, %v287
  %vm307 = vcmp.eq.s32.totalorder %v215, %v291
  %vm308 = vcmp.eq.s32.totalorder %v216, %v279
  %vm309 = vcmp.eq.s32.totalorder %v216, %v283
  %vm310 = vcmp.eq.s32.totalorder %v216, %v287
  %vm311 = vcmp.eq.s32.totalorder %v216, %v291
  %vm312 = vcmp.eq.s32.totalorder %v217, %v279
  %vm313 = vcmp.eq.s32.totalorder %v217, %v283
  %vm314 = vcmp.eq.s32.totalorder %v217, %v287
  %vm315 = vcmp.eq.s32.totalorder %v217, %v291
  %vm316 = vcmp.eq.s32.totalorder %v218, %v279
  %vm317 = vcmp.eq.s32.totalorder %v218, %v283
  %vm318 = vcmp.eq.s32.totalorder %v218, %v287
  %vm319 = vcmp.eq.s32.totalorder %v218, %v291
  %vm320 = vcmp.eq.s32.totalorder %v219, %v279
  %vm321 = vcmp.eq.s32.totalorder %v219, %v283
  %vm322 = vcmp.eq.s32.totalorder %v219, %v287
  %vm323 = vcmp.eq.s32.totalorder %v219, %v291
  %vm324 = vcmp.eq.s32.totalorder %v220, %v279
  %vm325 = vcmp.eq.s32.totalorder %v220, %v283
  %vm326 = vcmp.eq.s32.totalorder %v220, %v287
  %vm327 = vcmp.eq.s32.totalorder %v220, %v291
  %vm328 = vcmp.eq.s32.totalorder %v221, %v279
  %vm329 = vcmp.eq.s32.totalorder %v221, %v283
  %vm330 = vcmp.eq.s32.totalorder %v221, %v287
  %vm331 = vcmp.eq.s32.totalorder %v221, %v291
  %vm332 = vcmp.eq.s32.totalorder %v222, %v279
  %vm333 = vcmp.eq.s32.totalorder %v222, %v283
  %vm334 = vcmp.eq.s32.totalorder %v222, %v287
  %vm335 = vcmp.eq.s32.totalorder %v222, %v291
  %vm336 = vcmp.eq.s32.totalorder %v223, %v279
  %vm337 = vcmp.eq.s32.totalorder %v223, %v283
  %vm338 = vcmp.eq.s32.totalorder %v223, %v287
  %vm339 = vcmp.eq.s32.totalorder %v223, %v291
  %vm340 = vcmp.eq.s32.totalorder %v224, %v279
  %vm341 = vcmp.eq.s32.totalorder %v224, %v283
  %vm342 = vcmp.eq.s32.totalorder %v224, %v287
  %vm343 = vcmp.eq.s32.totalorder %v224, %v291
  %vm344 = vcmp.eq.s32.totalorder %v225, %v279
  %vm345 = vcmp.eq.s32.totalorder %v225, %v283
  %vm346 = vcmp.eq.s32.totalorder %v225, %v287
  %vm347 = vcmp.eq.s32.totalorder %v225, %v291
  %vm348 = vcmp.eq.s32.totalorder %v226, %v279
  %vm349 = vcmp.eq.s32.totalorder %v226, %v283
  %vm350 = vcmp.eq.s32.totalorder %v226, %v287
  %vm351 = vcmp.eq.s32.totalorder %v226, %v291
  %vm352 = vcmp.eq.s32.totalorder %v227, %v279
  %vm353 = vcmp.eq.s32.totalorder %v227, %v283
  %vm354 = vcmp.eq.s32.totalorder %v227, %v287
  %vm355 = vcmp.eq.s32.totalorder %v227, %v291
  %vm356 = vcmp.eq.s32.totalorder %v228, %v279
  %vm357 = vcmp.eq.s32.totalorder %v228, %v283
  %vm358 = vcmp.eq.s32.totalorder %v228, %v287
  %vm359 = vcmp.eq.s32.totalorder %v228, %v291
  %vm360 = vcmp.eq.s32.totalorder %v229, %v279
  %vm361 = vcmp.eq.s32.totalorder %v229, %v283
  %vm362 = vcmp.eq.s32.totalorder %v229, %v287
  %vm363 = vcmp.eq.s32.totalorder %v229, %v291
  %vm364 = vcmp.eq.s32.totalorder %v230, %v279
  %vm365 = vcmp.eq.s32.totalorder %v230, %v283
  %vm366 = vcmp.eq.s32.totalorder %v230, %v287
  %vm367 = vcmp.eq.s32.totalorder %v230, %v291
  %vm368 = vcmp.eq.s32.totalorder %v231, %v279
  %vm369 = vcmp.eq.s32.totalorder %v231, %v283
  %vm370 = vcmp.eq.s32.totalorder %v231, %v287
  %vm371 = vcmp.eq.s32.totalorder %v231, %v291
  %vm372 = vcmp.eq.s32.totalorder %v232, %v279
  %vm373 = vcmp.eq.s32.totalorder %v232, %v283
  %vm374 = vcmp.eq.s32.totalorder %v232, %v287
  %vm375 = vcmp.eq.s32.totalorder %v232, %v291
  %vm376 = vcmp.eq.s32.totalorder %v233, %v279
  %vm377 = vcmp.eq.s32.totalorder %v233, %v283
  %vm378 = vcmp.eq.s32.totalorder %v233, %v287
  %vm379 = vcmp.eq.s32.totalorder %v233, %v291
  %vm380 = vcmp.eq.s32.totalorder %v234, %v279
  %vm381 = vcmp.eq.s32.totalorder %v234, %v283
  %vm382 = vcmp.eq.s32.totalorder %v234, %v287
  %vm383 = vcmp.eq.s32.totalorder %v234, %v291
  %vm384 = vcmp.eq.s32.totalorder %v235, %v279
  %vm385 = vcmp.eq.s32.totalorder %v235, %v283
  %vm386 = vcmp.eq.s32.totalorder %v235, %v287
  %vm387 = vcmp.eq.s32.totalorder %v235, %v291
  %vm388 = vcmp.eq.s32.totalorder %v236, %v279
  %vm389 = vcmp.eq.s32.totalorder %v236, %v283
  %vm390 = vcmp.eq.s32.totalorder %v236, %v287
  %vm391 = vcmp.eq.s32.totalorder %v236, %v291
  %vm392 = vcmp.eq.s32.totalorder %v237, %v279
  %vm393 = vcmp.eq.s32.totalorder %v237, %v283
  %vm394 = vcmp.eq.s32.totalorder %v237, %v287
  %vm395 = vcmp.eq.s32.totalorder %v237, %v291
  %vm396 = vcmp.eq.s32.totalorder %v238, %v279
  %vm397 = vcmp.eq.s32.totalorder %v238, %v283
  %vm398 = vcmp.eq.s32.totalorder %v238, %v287
  %vm399 = vcmp.eq.s32.totalorder %v238, %v291
  %vm400 = vcmp.eq.s32.totalorder %v239, %v279
  %vm401 = vcmp.eq.s32.totalorder %v239, %v283
  %vm402 = vcmp.eq.s32.totalorder %v239, %v287
  %vm403 = vcmp.eq.s32.totalorder %v239, %v291
  %vm404 = vcmp.eq.s32.totalorder %v240, %v279
  %vm405 = vcmp.eq.s32.totalorder %v240, %v283
  %vm406 = vcmp.eq.s32.totalorder %v240, %v287
  %vm407 = vcmp.eq.s32.totalorder %v240, %v291
  %vm408 = vcmp.eq.s32.totalorder %v241, %v279
  %vm409 = vcmp.eq.s32.totalorder %v241, %v283
  %vm410 = vcmp.eq.s32.totalorder %v241, %v287
  %vm411 = vcmp.eq.s32.totalorder %v241, %v291
  %vm412 = vcmp.eq.s32.totalorder %v242, %v279
  %vm413 = vcmp.eq.s32.totalorder %v242, %v283
  %vm414 = vcmp.eq.s32.totalorder %v242, %v287
  %vm415 = vcmp.eq.s32.totalorder %v242, %v291
  %vm416 = vcmp.eq.s32.totalorder %v243, %v279
  %vm417 = vcmp.eq.s32.totalorder %v243, %v283
  %vm418 = vcmp.eq.s32.totalorder %v243, %v287
  %vm419 = vcmp.eq.s32.totalorder %v243, %v291
  %vm420 = vcmp.eq.s32.totalorder %v244, %v279
  %vm421 = vcmp.eq.s32.totalorder %v244, %v283
  %vm422 = vcmp.eq.s32.totalorder %v244, %v287
  %vm423 = vcmp.eq.s32.totalorder %v244, %v291
  %vm424 = vcmp.eq.s32.totalorder %v245, %v279
  %vm425 = vcmp.eq.s32.totalorder %v245, %v283
  %vm426 = vcmp.eq.s32.totalorder %v245, %v287
  %vm427 = vcmp.eq.s32.totalorder %v245, %v291
  %vm428 = vcmp.eq.s32.totalorder %v246, %v279
  %vm429 = vcmp.eq.s32.totalorder %v246, %v283
  %vm430 = vcmp.eq.s32.totalorder %v246, %v287
  %vm431 = vcmp.eq.s32.totalorder %v246, %v291
  %vm432 = vcmp.eq.s32.totalorder %v247, %v279
  %vm433 = vcmp.eq.s32.totalorder %v247, %v283
  %vm434 = vcmp.eq.s32.totalorder %v247, %v287
  %vm435 = vcmp.eq.s32.totalorder %v247, %v291
  %vm436 = vcmp.eq.s32.totalorder %v248, %v279
  %vm437 = vcmp.eq.s32.totalorder %v248, %v283
  %vm438 = vcmp.eq.s32.totalorder %v248, %v287
  %vm439 = vcmp.eq.s32.totalorder %v248, %v291
  %vm440 = vcmp.eq.s32.totalorder %v249, %v279
  %vm441 = vcmp.eq.s32.totalorder %v249, %v283
  %vm442 = vcmp.eq.s32.totalorder %v249, %v287
  %vm443 = vcmp.eq.s32.totalorder %v249, %v291
  %vm444 = vcmp.eq.s32.totalorder %v250, %v279
  %vm445 = vcmp.eq.s32.totalorder %v250, %v283
  %vm446 = vcmp.eq.s32.totalorder %v250, %v287
  %vm447 = vcmp.eq.s32.totalorder %v250, %v291
  %vm448 = vcmp.eq.s32.totalorder %v251, %v279
  %vm449 = vcmp.eq.s32.totalorder %v251, %v283
  %vm450 = vcmp.eq.s32.totalorder %v251, %v287
  %vm451 = vcmp.eq.s32.totalorder %v251, %v291
  %vm452 = vcmp.eq.s32.totalorder %v252, %v279
  %vm453 = vcmp.eq.s32.totalorder %v252, %v283
  %vm454 = vcmp.eq.s32.totalorder %v252, %v287
  %vm455 = vcmp.eq.s32.totalorder %v252, %v291
  %vm456 = vcmp.eq.s32.totalorder %v253, %v279
  %vm457 = vcmp.eq.s32.totalorder %v253, %v283
  %vm458 = vcmp.eq.s32.totalorder %v253, %v287
  %vm459 = vcmp.eq.s32.totalorder %v253, %v291
  %vm460 = vcmp.eq.s32.totalorder %v254, %v279
  %vm461 = vcmp.eq.s32.totalorder %v254, %v283
  %vm462 = vcmp.eq.s32.totalorder %v254, %v287
  %vm463 = vcmp.eq.s32.totalorder %v254, %v291
  %vm464 = vcmp.eq.s32.totalorder %v255, %v279
  %vm465 = vcmp.eq.s32.totalorder %v255, %v283
  %vm466 = vcmp.eq.s32.totalorder %v255, %v287
  %vm467 = vcmp.eq.s32.totalorder %v255, %v291
  %vm468 = vcmp.eq.s32.totalorder %v256, %v279
  %vm469 = vcmp.eq.s32.totalorder %v256, %v283
  %vm470 = vcmp.eq.s32.totalorder %v256, %v287
  %vm471 = vcmp.eq.s32.totalorder %v256, %v291
  %vm472 = vcmp.eq.s32.totalorder %v257, %v279
  %vm473 = vcmp.eq.s32.totalorder %v257, %v283
  %vm474 = vcmp.eq.s32.totalorder %v257, %v287
  %vm475 = vcmp.eq.s32.totalorder %v257, %v291
  %vm476 = vcmp.eq.s32.totalorder %v258, %v279
  %vm477 = vcmp.eq.s32.totalorder %v258, %v283
  %vm478 = vcmp.eq.s32.totalorder %v258, %v287
  %vm479 = vcmp.eq.s32.totalorder %v258, %v291
  %vm480 = vcmp.eq.s32.totalorder %v259, %v279
  %vm481 = vcmp.eq.s32.totalorder %v259, %v283
  %vm482 = vcmp.eq.s32.totalorder %v259, %v287
  %vm483 = vcmp.eq.s32.totalorder %v259, %v291
  %vm484 = vcmp.eq.s32.totalorder %v260, %v279
  %vm485 = vcmp.eq.s32.totalorder %v260, %v283
  %vm486 = vcmp.eq.s32.totalorder %v260, %v287
  %vm487 = vcmp.eq.s32.totalorder %v260, %v291
  %vm488 = vcmp.eq.s32.totalorder %v261, %v279
  %vm489 = vcmp.eq.s32.totalorder %v261, %v283
  %vm490 = vcmp.eq.s32.totalorder %v261, %v287
  %vm491 = vcmp.eq.s32.totalorder %v261, %v291
  %vm492 = vcmp.eq.s32.totalorder %v262, %v279
  %vm493 = vcmp.eq.s32.totalorder %v262, %v283
  %vm494 = vcmp.eq.s32.totalorder %v262, %v287
  %vm495 = vcmp.eq.s32.totalorder %v262, %v291
  %vm496 = vcmp.eq.s32.totalorder %v263, %v279
  %vm497 = vcmp.eq.s32.totalorder %v263, %v283
  %vm498 = vcmp.eq.s32.totalorder %v263, %v287
  %vm499 = vcmp.eq.s32.totalorder %v263, %v291
  %vm500 = vcmp.eq.s32.totalorder %v264, %v279
  %vm501 = vcmp.eq.s32.totalorder %v264, %v283
  %vm502 = vcmp.eq.s32.totalorder %v264, %v287
  %vm503 = vcmp.eq.s32.totalorder %v264, %v291
  %vm504 = vcmp.eq.s32.totalorder %v265, %v279
  %vm505 = vcmp.eq.s32.totalorder %v265, %v283
  %vm506 = vcmp.eq.s32.totalorder %v265, %v287
  %vm507 = vcmp.eq.s32.totalorder %v265, %v291
  %vm508 = vcmp.eq.s32.totalorder %v266, %v279
  %vm509 = vcmp.eq.s32.totalorder %v266, %v283
  %vm510 = vcmp.eq.s32.totalorder %v266, %v287
  %vm511 = vcmp.eq.s32.totalorder %v266, %v291
  %vm512 = vcmp.eq.s32.totalorder %v267, %v279
  %vm513 = vcmp.eq.s32.totalorder %v267, %v283
  %vm514 = vcmp.eq.s32.totalorder %v267, %v287
  %vm515 = vcmp.eq.s32.totalorder %v267, %v291
  %vm516 = vcmp.eq.s32.totalorder %v268, %v279
  %vm517 = vcmp.eq.s32.totalorder %v268, %v283
  %vm518 = vcmp.eq.s32.totalorder %v268, %v287
  %vm519 = vcmp.eq.s32.totalorder %v268, %v291
  %vm520 = vcmp.eq.s32.totalorder %v269, %v279
  %vm521 = vcmp.eq.s32.totalorder %v269, %v283
  %vm522 = vcmp.eq.s32.totalorder %v269, %v287
  %vm523 = vcmp.eq.s32.totalorder %v269, %v291
  %vm524 = vcmp.eq.s32.totalorder %v270, %v279
  %vm525 = vcmp.eq.s32.totalorder %v270, %v283
  %vm526 = vcmp.eq.s32.totalorder %v270, %v287
  %vm527 = vcmp.eq.s32.totalorder %v270, %v291
  %vm528 = vcmp.eq.s32.totalorder %v271, %v279
  %vm529 = vcmp.eq.s32.totalorder %v271, %v283
  %vm530 = vcmp.eq.s32.totalorder %v271, %v287
  %vm531 = vcmp.eq.s32.totalorder %v271, %v291
  %vm532 = vcmp.eq.s32.totalorder %v272, %v279
  %vm533 = vcmp.eq.s32.totalorder %v272, %v283
  %vm534 = vcmp.eq.s32.totalorder %v272, %v287
  %vm535 = vcmp.eq.s32.totalorder %v272, %v291
  %vm536 = vcmp.eq.s32.totalorder %v273, %v279
  %vm537 = vcmp.eq.s32.totalorder %v273, %v283
  %vm538 = vcmp.eq.s32.totalorder %v273, %v287
  %vm539 = vcmp.eq.s32.totalorder %v273, %v291
  %vm540 = vcmp.eq.s32.totalorder %v274, %v279
  %vm541 = vcmp.eq.s32.totalorder %v274, %v283
  %vm542 = vcmp.eq.s32.totalorder %v274, %v287
  %vm543 = vcmp.eq.s32.totalorder %v274, %v291
  %vm544 = vcmp.eq.s32.totalorder %v275, %v279
  %vm545 = vcmp.eq.s32.totalorder %v275, %v283
  %vm546 = vcmp.eq.s32.totalorder %v275, %v287
  %vm547 = vcmp.eq.s32.totalorder %v275, %v291
  %v548 = vsel %vm292, 1, 0
  %v549 = vsel %vm293, 1, 0
  %v550 = vsel %vm294, 1, 0
  %v551 = vsel %vm295, 1, 0
  %v552 = vsel %vm296, 1, 0
  %v553 = vsel %vm297, 1, 0
  %v554 = vsel %vm298, 1, 0
  %v555 = vsel %vm299, 1, 0
  %v556 = vsel %vm300, 1, 0
  %v557 = vsel %vm301, 1, 0
  %v558 = vsel %vm302, 1, 0
  %v559 = vsel %vm303, 1, 0
  %v560 = vsel %vm304, 1, 0
  %v561 = vsel %vm305, 1, 0
  %v562 = vsel %vm306, 1, 0
  %v563 = vsel %vm307, 1, 0
  %v564 = vsel %vm308, 1, 0
  %v565 = vsel %vm309, 1, 0
  %v566 = vsel %vm310, 1, 0
  %v567 = vsel %vm311, 1, 0
  %v568 = vsel %vm312, 1, 0
  %v569 = vsel %vm313, 1, 0
  %v570 = vsel %vm314, 1, 0
  %v571 = vsel %vm315, 1, 0
  %v572 = vsel %vm316, 1, 0
  %v573 = vsel %vm317, 1, 0
  %v574 = vsel %vm318, 1, 0
  %v575 = vsel %vm319, 1, 0
  %v576 = vsel %vm320, 1, 0
  %v577 = vsel %vm321, 1, 0
  %v578 = vsel %vm322, 1, 0
  %v579 = vsel %vm323, 1, 0
  %v580 = vsel %vm324, 1, 0
  %v581 = vsel %vm325, 1, 0
  %v582 = vsel %vm326, 1, 0
  %v583 = vsel %vm327, 1, 0
  %v584 = vsel %vm328, 1, 0
  %v585 = vsel %vm329, 1, 0
  %v586 = vsel %vm330, 1, 0
  %v587 = vsel %vm331, 1, 0
  %v588 = vsel %vm332, 1, 0
  %v589 = vsel %vm333, 1, 0
  %v590 = vsel %vm334, 1, 0
  %v591 = vsel %vm335, 1, 0
  %v592 = vsel %vm336, 1, 0
  %v593 = vsel %vm337, 1, 0
  %v594 = vsel %vm338, 1, 0
  %v595 = vsel %vm339, 1, 0
  %v596 = vsel %vm340, 1, 0
  %v597 = vsel %vm341, 1, 0
  %v598 = vsel %vm342, 1, 0
  %v599 = vsel %vm343, 1, 0
  %v600 = vsel %vm344, 1, 0
  %v601 = vsel %vm345, 1, 0
  %v602 = vsel %vm346, 1, 0
  %v603 = vsel %vm347, 1, 0
  %v604 = vsel %vm348, 1, 0
  %v605 = vsel %vm349, 1, 0
  %v606 = vsel %vm350, 1, 0
  %v607 = vsel %vm351, 1, 0
  %v608 = vsel %vm352, 1, 0
  %v609 = vsel %vm353, 1, 0
  %v610 = vsel %vm354, 1, 0
  %v611 = vsel %vm355, 1, 0
  %v612 = vsel %vm356, 1, 0
  %v613 = vsel %vm357, 1, 0
  %v614 = vsel %vm358, 1, 0
  %v615 = vsel %vm359, 1, 0
  %v616 = vsel %vm360, 1, 0
  %v617 = vsel %vm361, 1, 0
  %v618 = vsel %vm362, 1, 0
  %v619 = vsel %vm363, 1, 0
  %v620 = vsel %vm364, 1, 0
  %v621 = vsel %vm365, 1, 0
  %v622 = vsel %vm366, 1, 0
  %v623 = vsel %vm367, 1, 0
  %v624 = vsel %vm368, 1, 0
  %v625 = vsel %vm369, 1, 0
  %v626 = vsel %vm370, 1, 0
  %v627 = vsel %vm371, 1, 0
  %v628 = vsel %vm372, 1, 0
  %v629 = vsel %vm373, 1, 0
  %v630 = vsel %vm374, 1, 0
  %v631 = vsel %vm375, 1, 0
  %v632 = vsel %vm376, 1, 0
  %v633 = vsel %vm377, 1, 0
  %v634 = vsel %vm378, 1, 0
  %v635 = vsel %vm379, 1, 0
  %v636 = vsel %vm380, 1, 0
  %v637 = vsel %vm381, 1, 0
  %v638 = vsel %vm382, 1, 0
  %v639 = vsel %vm383, 1, 0
  %v640 = vsel %vm384, 1, 0
  %v641 = vsel %vm385, 1, 0
  %v642 = vsel %vm386, 1, 0
  %v643 = vsel %vm387, 1, 0
  %v644 = vsel %vm388, 1, 0
  %v645 = vsel %vm389, 1, 0
  %v646 = vsel %vm390, 1, 0
  %v647 = vsel %vm391, 1, 0
  %v648 = vsel %vm392, 1, 0
  %v649 = vsel %vm393, 1, 0
  %v650 = vsel %vm394, 1, 0
  %v651 = vsel %vm395, 1, 0
  %v652 = vsel %vm396, 1, 0
  %v653 = vsel %vm397, 1, 0
  %v654 = vsel %vm398, 1, 0
  %v655 = vsel %vm399, 1, 0
  %v656 = vsel %vm400, 1, 0
  %v657 = vsel %vm401, 1, 0
  %v658 = vsel %vm402, 1, 0
  %v659 = vsel %vm403, 1, 0
  %v660 = vsel %vm404, 1, 0
  %v661 = vsel %vm405, 1, 0
  %v662 = vsel %vm406, 1, 0
  %v663 = vsel %vm407, 1, 0
  %v664 = vsel %vm408, 1, 0
  %v665 = vsel %vm409, 1, 0
  %v666 = vsel %vm410, 1, 0
  %v667 = vsel %vm411, 1, 0
  %v668 = vsel %vm412, 1, 0
  %v669 = vsel %vm413, 1, 0
  %v670 = vsel %vm414, 1, 0
  %v671 = vsel %vm415, 1, 0
  %v672 = vsel %vm416, 1, 0
  %v673 = vsel %vm417, 1, 0
  %v674 = vsel %vm418, 1, 0
  %v675 = vsel %vm419, 1, 0
  %v676 = vsel %vm420, 1, 0
  %v677 = vsel %vm421, 1, 0
  %v678 = vsel %vm422, 1, 0
  %v679 = vsel %vm423, 1, 0
  %v680 = vsel %vm424, 1, 0
  %v681 = vsel %vm425, 1, 0
  %v682 = vsel %vm426, 1, 0
  %v683 = vsel %vm427, 1, 0
  %v684 = vsel %vm428, 1, 0
  %v685 = vsel %vm429, 1, 0
  %v686 = vsel %vm430, 1, 0
  %v687 = vsel %vm431, 1, 0
  %v688 = vsel %vm432, 1, 0
  %v689 = vsel %vm433, 1, 0
  %v690 = vsel %vm434, 1, 0
  %v691 = vsel %vm435, 1, 0
  %v692 = vsel %vm436, 1, 0
  %v693 = vsel %vm437, 1, 0
  %v694 = vsel %vm438, 1, 0
  %v695 = vsel %vm439, 1, 0
  %v696 = vsel %vm440, 1, 0
  %v697 = vsel %vm441, 1, 0
  %v698 = vsel %vm442, 1, 0
  %v699 = vsel %vm443, 1, 0
  %v700 = vsel %vm444, 1, 0
  %v701 = vsel %vm445, 1, 0
  %v702 = vsel %vm446, 1, 0
  %v703 = vsel %vm447, 1, 0
  %v704 = vsel %vm448, 1, 0
  %v705 = vsel %vm449, 1, 0
  %v706 = vsel %vm450, 1, 0
  %v707 = vsel %vm451, 1, 0
  %v708 = vsel %vm452, 1, 0
  %v709 = vsel %vm453, 1, 0
  %v710 = vsel %vm454, 1, 0
  %v711 = vsel %vm455, 1, 0
  %v712 = vsel %vm456, 1, 0
  %v713 = vsel %vm457, 1, 0
  %v714 = vsel %vm458, 1, 0
  %v715 = vsel %vm459, 1, 0
  %v716 = vsel %vm460, 1, 0
  %v717 = vsel %vm461, 1, 0
  %v718 = vsel %vm462, 1, 0
  %v719 = vsel %vm463, 1, 0
  %v720 = vsel %vm464, 1, 0
  %v721 = vsel %vm465, 1, 0
  %v722 = vsel %vm466, 1, 0
  %v723 = vsel %vm467, 1, 0
  %v724 = vsel %vm468, 1, 0
  %v725 = vsel %vm469, 1, 0
  %v726 = vsel %vm470, 1, 0
  %v727 = vsel %vm471, 1, 0
  %v728 = vsel %vm472, 1, 0
  %v729 = vsel %vm473, 1, 0
  %v730 = vsel %vm474, 1, 0
  %v731 = vsel %vm475, 1, 0
  %v732 = vsel %vm476, 1, 0
  %v733 = vsel %vm477, 1, 0
  %v734 = vsel %vm478, 1, 0
  %v735 = vsel %vm479, 1, 0
  %v736 = vsel %vm480, 1, 0
  %v737 = vsel %vm481, 1, 0
  %v738 = vsel %vm482, 1, 0
  %v739 = vsel %vm483, 1, 0
  %v740 = vsel %vm484, 1, 0
  %v741 = vsel %vm485, 1, 0
  %v742 = vsel %vm486, 1, 0
  %v743 = vsel %vm487, 1, 0
  %v744 = vsel %vm488, 1, 0
  %v745 = vsel %vm489, 1, 0
  %v746 = vsel %vm490, 1, 0
  %v747 = vsel %vm491, 1, 0
  %v748 = vsel %vm492, 1, 0
  %v749 = vsel %vm493, 1, 0
  %v750 = vsel %vm494, 1, 0
  %v751 = vsel %vm495, 1, 0
  %v752 = vsel %vm496, 1, 0
  %v753 = vsel %vm497, 1, 0
  %v754 = vsel %vm498, 1, 0
  %v755 = vsel %vm499, 1, 0
  %v756 = vsel %vm500, 1, 0
  %v757 = vsel %vm501, 1, 0
  %v758 = vsel %vm502, 1, 0
  %v759 = vsel %vm503, 1, 0
  %v760 = vsel %vm504, 1, 0
  %v761 = vsel %vm505, 1, 0
  %v762 = vsel %vm506, 1, 0
  %v763 = vsel %vm507, 1, 0
  %v764 = vsel %vm508, 1, 0
  %v765 = vsel %vm509, 1, 0
  %v766 = vsel %vm510, 1, 0
  %v767 = vsel %vm511, 1, 0
  %v768 = vsel %vm512, 1, 0
  %v769 = vsel %vm513, 1, 0
  %v770 = vsel %vm514, 1, 0
  %v771 = vsel %vm515, 1, 0
  %v772 = vsel %vm516, 1, 0
  %v773 = vsel %vm517, 1, 0
  %v774 = vsel %vm518, 1, 0
  %v775 = vsel %vm519, 1, 0
  %v776 = vsel %vm520, 1, 0
  %v777 = vsel %vm521, 1, 0
  %v778 = vsel %vm522, 1, 0
  %v779 = vsel %vm523, 1, 0
  %v780 = vsel %vm524, 1, 0
  %v781 = vsel %vm525, 1, 0
  %v782 = vsel %vm526, 1, 0
  %v783 = vsel %vm527, 1, 0
  %v784 = vsel %vm528, 1, 0
  %v785 = vsel %vm529, 1, 0
  %v786 = vsel %vm530, 1, 0
  %v787 = vsel %vm531, 1, 0
  %v788 = vsel %vm532, 1, 0
  %v789 = vsel %vm533, 1, 0
  %v790 = vsel %vm534, 1, 0
  %v791 = vsel %vm535, 1, 0
  %v792 = vsel %vm536, 1, 0
  %v793 = vsel %vm537, 1, 0
  %v794 = vsel %vm538, 1, 0
  %v795 = vsel %vm539, 1, 0
  %v796 = vsel %vm540, 1, 0
  %v797 = vsel %vm541, 1, 0
  %v798 = vsel %vm542, 1, 0
  %v799 = vsel %vm543, 1, 0
  %v800 = vsel %vm544, 1, 0
  %v801 = vsel %vm545, 1, 0
  %v802 = vsel %vm546, 1, 0
  %v803 = vsel %vm547, 1, 0
  %v804 = vcvt.s32.f32 %v548
  %v805 = vcvt.s32.f32 %v549
  %v806 = vcvt.s32.f32 %v550
  %v807 = vcvt.s32.f32 %v551
  %v808 = vcvt.s32.f32 %v552
  %v809 = vcvt.s32.f32 %v553
  %v810 = vcvt.s32.f32 %v554
  %v811 = vcvt.s32.f32 %v555
  %v812 = vcvt.s32.f32 %v556
  %v813 = vcvt.s32.f32 %v557
  %v814 = vcvt.s32.f32 %v558
  %v815 = vcvt.s32.f32 %v559
  %v816 = vcvt.s32.f32 %v560
  %v817 = vcvt.s32.f32 %v561
  %v818 = vcvt.s32.f32 %v562
  %v819 = vcvt.s32.f32 %v563
  %v820 = vcvt.s32.f32 %v564
  %v821 = vcvt.s32.f32 %v565
  %v822 = vcvt.s32.f32 %v566
  %v823 = vcvt.s32.f32 %v567
  %v824 = vcvt.s32.f32 %v568
  %v825 = vcvt.s32.f32 %v569
  %v826 = vcvt.s32.f32 %v570
  %v827 = vcvt.s32.f32 %v571
  %v828 = vcvt.s32.f32 %v572
  %v829 = vcvt.s32.f32 %v573
  %v830 = vcvt.s32.f32 %v574
  %v831 = vcvt.s32.f32 %v575
  %v832 = vcvt.s32.f32 %v576
  %v833 = vcvt.s32.f32 %v577
  %v834 = vcvt.s32.f32 %v578
  %v835 = vcvt.s32.f32 %v579
  %v836 = vcvt.s32.f32 %v580
  %v837 = vcvt.s32.f32 %v581
  %v838 = vcvt.s32.f32 %v582
  %v839 = vcvt.s32.f32 %v583
  %v840 = vcvt.s32.f32 %v584
  %v841 = vcvt.s32.f32 %v585
  %v842 = vcvt.s32.f32 %v586
  %v843 = vcvt.s32.f32 %v587
  %v844 = vcvt.s32.f32 %v588
  %v845 = vcvt.s32.f32 %v589
  %v846 = vcvt.s32.f32 %v590
  %v847 = vcvt.s32.f32 %v591
  %v848 = vcvt.s32.f32 %v592
  %v849 = vcvt.s32.f32 %v593
  %v850 = vcvt.s32.f32 %v594
  %v851 = vcvt.s32.f32 %v595
  %v852 = vcvt.s32.f32 %v596
  %v853 = vcvt.s32.f32 %v597
  %v854 = vcvt.s32.f32 %v598
  %v855 = vcvt.s32.f32 %v599
  %v856 = vcvt.s32.f32 %v600
  %v857 = vcvt.s32.f32 %v601
  %v858 = vcvt.s32.f32 %v602
  %v859 = vcvt.s32.f32 %v603
  %v860 = vcvt.s32.f32 %v604
  %v861 = vcvt.s32.f32 %v605
  %v862 = vcvt.s32.f32 %v606
  %v863 = vcvt.s32.f32 %v607
  %v864 = vcvt.s32.f32 %v608
  %v865 = vcvt.s32.f32 %v609
  %v866 = vcvt.s32.f32 %v610
  %v867 = vcvt.s32.f32 %v611
  %v868 = vcvt.s32.f32 %v612
  %v869 = vcvt.s32.f32 %v613
  %v870 = vcvt.s32.f32 %v614
  %v871 = vcvt.s32.f32 %v615
  %v872 = vcvt.s32.f32 %v616
  %v873 = vcvt.s32.f32 %v617
  %v874 = vcvt.s32.f32 %v618
  %v875 = vcvt.s32.f32 %v619
  %v876 = vcvt.s32.f32 %v620
  %v877 = vcvt.s32.f32 %v621
  %v878 = vcvt.s32.f32 %v622
  %v879 = vcvt.s32.f32 %v623
  %v880 = vcvt.s32.f32 %v624
  %v881 = vcvt.s32.f32 %v625
  %v882 = vcvt.s32.f32 %v626
  %v883 = vcvt.s32.f32 %v627
  %v884 = vcvt.s32.f32 %v628
  %v885 = vcvt.s32.f32 %v629
  %v886 = vcvt.s32.f32 %v630
  %v887 = vcvt.s32.f32 %v631
  %v888 = vcvt.s32.f32 %v632
  %v889 = vcvt.s32.f32 %v633
  %v890 = vcvt.s32.f32 %v634
  %v891 = vcvt.s32.f32 %v635
  %v892 = vcvt.s32.f32 %v636
  %v893 = vcvt.s32.f32 %v637
  %v894 = vcvt.s32.f32 %v638
  %v895 = vcvt.s32.f32 %v639
  %v896 = vcvt.s32.f32 %v640
  %v897 = vcvt.s32.f32 %v641
  %v898 = vcvt.s32.f32 %v642
  %v899 = vcvt.s32.f32 %v643
  %v900 = vcvt.s32.f32 %v644
  %v901 = vcvt.s32.f32 %v645
  %v902 = vcvt.s32.f32 %v646
  %v903 = vcvt.s32.f32 %v647
  %v904 = vcvt.s32.f32 %v648
  %v905 = vcvt.s32.f32 %v649
  %v906 = vcvt.s32.f32 %v650
  %v907 = vcvt.s32.f32 %v651
  %v908 = vcvt.s32.f32 %v652
  %v909 = vcvt.s32.f32 %v653
  %v910 = vcvt.s32.f32 %v654
  %v911 = vcvt.s32.f32 %v655
  %v912 = vcvt.s32.f32 %v656
  %v913 = vcvt.s32.f32 %v657
  %v914 = vcvt.s32.f32 %v658
  %v915 = vcvt.s32.f32 %v659
  %v916 = vcvt.s32.f32 %v660
  %v917 = vcvt.s32.f32 %v661
  %v918 = vcvt.s32.f32 %v662
  %v919 = vcvt.s32.f32 %v663
  %v920 = vcvt.s32.f32 %v664
  %v921 = vcvt.s32.f32 %v665
  %v922 = vcvt.s32.f32 %v666
  %v923 = vcvt.s32.f32 %v667
  %v924 = vcvt.s32.f32 %v668
  %v925 = vcvt.s32.f32 %v669
  %v926 = vcvt.s32.f32 %v670
  %v927 = vcvt.s32.f32 %v671
  %v928 = vcvt.s32.f32 %v672
  %v929 = vcvt.s32.f32 %v673
  %v930 = vcvt.s32.f32 %v674
  %v931 = vcvt.s32.f32 %v675
  %v932 = vcvt.s32.f32 %v676
  %v933 = vcvt.s32.f32 %v677
  %v934 = vcvt.s32.f32 %v678
  %v935 = vcvt.s32.f32 %v679
  %v936 = vcvt.s32.f32 %v680
  %v937 = vcvt.s32.f32 %v681
  %v938 = vcvt.s32.f32 %v682
  %v939 = vcvt.s32.f32 %v683
  %v940 = vcvt.s32.f32 %v684
  %v941 = vcvt.s32.f32 %v685
  %v942 = vcvt.s32.f32 %v686
  %v943 = vcvt.s32.f32 %v687
  %v944 = vcvt.s32.f32 %v688
  %v945 = vcvt.s32.f32 %v689
  %v946 = vcvt.s32.f32 %v690
  %v947 = vcvt.s32.f32 %v691
  %v948 = vcvt.s32.f32 %v692
  %v949 = vcvt.s32.f32 %v693
  %v950 = vcvt.s32.f32 %v694
  %v951 = vcvt.s32.f32 %v695
  %v952 = vcvt.s32.f32 %v696
  %v953 = vcvt.s32.f32 %v697
  %v954 = vcvt.s32.f32 %v698
  %v955 = vcvt.s32.f32 %v699
  %v956 = vcvt.s32.f32 %v700
  %v957 = vcvt.s32.f32 %v701
  %v958 = vcvt.s32.f32 %v702
  %v959 = vcvt.s32.f32 %v703
  %v960 = vcvt.s32.f32 %v704
  %v961 = vcvt.s32.f32 %v705
  %v962 = vcvt.s32.f32 %v706
  %v963 = vcvt.s32.f32 %v707
  %v964 = vcvt.s32.f32 %v708
  %v965 = vcvt.s32.f32 %v709
  %v966 = vcvt.s32.f32 %v710
  %v967 = vcvt.s32.f32 %v711
  %v968 = vcvt.s32.f32 %v712
  %v969 = vcvt.s32.f32 %v713
  %v970 = vcvt.s32.f32 %v714
  %v971 = vcvt.s32.f32 %v715
  %v972 = vcvt.s32.f32 %v716
  %v973 = vcvt.s32.f32 %v717
  %v974 = vcvt.s32.f32 %v718
  %v975 = vcvt.s32.f32 %v719
  %v976 = vcvt.s32.f32 %v720
  %v977 = vcvt.s32.f32 %v721
  %v978 = vcvt.s32.f32 %v722
  %v979 = vcvt.s32.f32 %v723
  %v980 = vcvt.s32.f32 %v724
  %v981 = vcvt.s32.f32 %v725
  %v982 = vcvt.s32.f32 %v726
  %v983 = vcvt.s32.f32 %v727
  %v984 = vcvt.s32.f32 %v728
  %v985 = vcvt.s32.f32 %v729
  %v986 = vcvt.s32.f32 %v730
  %v987 = vcvt.s32.f32 %v731
  %v988 = vcvt.s32.f32 %v732
  %v989 = vcvt.s32.f32 %v733
  %v990 = vcvt.s32.f32 %v734
  %v991 = vcvt.s32.f32 %v735
  %v992 = vcvt.s32.f32 %v736
  %v993 = vcvt.s32.f32 %v737
  %v994 = vcvt.s32.f32 %v738
  %v995 = vcvt.s32.f32 %v739
  %v996 = vcvt.s32.f32 %v740
  %v997 = vcvt.s32.f32 %v741
  %v998 = vcvt.s32.f32 %v742
  %v999 = vcvt.s32.f32 %v743
  %v1000 = vcvt.s32.f32 %v744
  %v1001 = vcvt.s32.f32 %v745
  %v1002 = vcvt.s32.f32 %v746
  %v1003 = vcvt.s32.f32 %v747
  %v1004 = vcvt.s32.f32 %v748
  %v1005 = vcvt.s32.f32 %v749
  %v1006 = vcvt.s32.f32 %v750
  %v1007 = vcvt.s32.f32 %v751
  %v1008 = vcvt.s32.f32 %v752
  %v1009 = vcvt.s32.f32 %v753
  %v1010 = vcvt.s32.f32 %v754
  %v1011 = vcvt.s32.f32 %v755
  %v1012 = vcvt.s32.f32 %v756
  %v1013 = vcvt.s32.f32 %v757
  %v1014 = vcvt.s32.f32 %v758
  %v1015 = vcvt.s32.f32 %v759
  %v1016 = vcvt.s32.f32 %v760
  %v1017 = vcvt.s32.f32 %v761
  %v1018 = vcvt.s32.f32 %v762
  %v1019 = vcvt.s32.f32 %v763
  %v1020 = vcvt.s32.f32 %v764
  %v1021 = vcvt.s32.f32 %v765
  %v1022 = vcvt.s32.f32 %v766
  %v1023 = vcvt.s32.f32 %v767
  %v1024 = vcvt.s32.f32 %v768
  %v1025 = vcvt.s32.f32 %v769
  %v1026 = vcvt.s32.f32 %v770
  %v1027 = vcvt.s32.f32 %v771
  %v1028 = vcvt.s32.f32 %v772
  %v1029 = vcvt.s32.f32 %v773
  %v1030 = vcvt.s32.f32 %v774
  %v1031 = vcvt.s32.f32 %v775
  %v1032 = vcvt.s32.f32 %v776
  %v1033 = vcvt.s32.f32 %v777
  %v1034 = vcvt.s32.f32 %v778
  %v1035 = vcvt.s32.f32 %v779
  %v1036 = vcvt.s32.f32 %v780
  %v1037 = vcvt.s32.f32 %v781
  %v1038 = vcvt.s32.f32 %v782
  %v1039 = vcvt.s32.f32 %v783
  %v1040 = vcvt.s32.f32 %v784
  %v1041 = vcvt.s32.f32 %v785
  %v1042 = vcvt.s32.f32 %v786
  %v1043 = vcvt.s32.f32 %v787
  %v1044 = vcvt.s32.f32 %v788
  %v1045 = vcvt.s32.f32 %v789
  %v1046 = vcvt.s32.f32 %v790
  %v1047 = vcvt.s32.f32 %v791
  %v1048 = vcvt.s32.f32 %v792
  %v1049 = vcvt.s32.f32 %v793
  %v1050 = vcvt.s32.f32 %v794
  %v1051 = vcvt.s32.f32 %v795
  %v1052 = vcvt.s32.f32 %v796
  %v1053 = vcvt.s32.f32 %v797
  %v1054 = vcvt.s32.f32 %v798
  %v1055 = vcvt.s32.f32 %v799
  %v1056 = vcvt.s32.f32 %v800
  %v1057 = vcvt.s32.f32 %v801
  %v1058 = vcvt.s32.f32 %v802
  %v1059 = vcvt.s32.f32 %v803
  %v1060 = vld [vmem:[%s2] sm:$0xff]
  %v1061 = vld [vmem:[%s2 + $0x8] sm:$0xff]
  %v1062 = vld [vmem:[%s2 + $0x10] sm:$0xff]
  %v1063 = vld [vmem:[%s2 + $0x18] sm:$0xff]
  %v1064 = vld [vmem:[%s2 + $0x20] sm:$0xff]
  %v1065 = vld [vmem:[%s2 + $0x28] sm:$0xff]
  %v1066 = vld [vmem:[%s2 + $0x30] sm:$0xff]
  %v1067 = vld [vmem:[%s2 + $0x38] sm:$0xff]
  %v1068 = vld [vmem:[%s2 + $0x40] sm:$0xff]
  %v1069 = vld [vmem:[%s2 + $0x48] sm:$0xff]
  %v1070 = vld [vmem:[%s2 + $0x50] sm:$0xff]
  %v1071 = vld [vmem:[%s2 + $0x58] sm:$0xff]
  %v1072 = vld [vmem:[%s2 + $0x60] sm:$0xff]
  %v1073 = vld [vmem:[%s2 + $0x68] sm:$0xff]
  %v1074 = vld [vmem:[%s2 + $0x70] sm:$0xff]
  %v1075 = vld [vmem:[%s2 + $0x78] sm:$0xff]
  %v1076 = vld [vmem:[%s2 + $0x80] sm:$0xff]
  %v1077 = vld [vmem:[%s2 + $0x88] sm:$0xff]
  %v1078 = vld [vmem:[%s2 + $0x90] sm:$0xff]
  %v1079 = vld [vmem:[%s2 + $0x98] sm:$0xff]
  %v1080 = vld [vmem:[%s2 + $0xa0] sm:$0xff]
  %v1081 = vld [vmem:[%s2 + $0xa8] sm:$0xff]
  %v1082 = vld [vmem:[%s2 + $0xb0] sm:$0xff]
  %v1083 = vld [vmem:[%s2 + $0xb8] sm:$0xff]
  %v1084 = vld [vmem:[%s2 + $0xc0] sm:$0xff]
  %v1085 = vld [vmem:[%s2 + $0xc8] sm:$0xff]
  %v1086 = vld [vmem:[%s2 + $0xd0] sm:$0xff]
  %v1087 = vld [vmem:[%s2 + $0xd8] sm:$0xff]
  %v1088 = vld [vmem:[%s2 + $0xe0] sm:$0xff]
  %v1089 = vld [vmem:[%s2 + $0xe8] sm:$0xff]
  %v1090 = vld [vmem:[%s2 + $0xf0] sm:$0xff]
  %v1091 = vld [vmem:[%s2 + $0xf8] sm:$0xff]
  %v1092 = vld [vmem:[%s2 + $0x100] sm:$0xff]
  %v1093 = vld [vmem:[%s2 + $0x108] sm:$0xff]
  %v1094 = vld [vmem:[%s2 + $0x110] sm:$0xff]
  %v1095 = vld [vmem:[%s2 + $0x118] sm:$0xff]
  %v1096 = vld [vmem:[%s2 + $0x120] sm:$0xff]
  %v1097 = vld [vmem:[%s2 + $0x128] sm:$0xff]
  %v1098 = vld [vmem:[%s2 + $0x130] sm:$0xff]
  %v1099 = vld [vmem:[%s2 + $0x138] sm:$0xff]
  %v1100 = vld [vmem:[%s2 + $0x140] sm:$0xff]
  %v1101 = vld [vmem:[%s2 + $0x148] sm:$0xff]
  %v1102 = vld [vmem:[%s2 + $0x150] sm:$0xff]
  %v1103 = vld [vmem:[%s2 + $0x158] sm:$0xff]
  %v1104 = vld [vmem:[%s2 + $0x160] sm:$0xff]
  %v1105 = vld [vmem:[%s2 + $0x168] sm:$0xff]
  %v1106 = vld [vmem:[%s2 + $0x170] sm:$0xff]
  %v1107 = vld [vmem:[%s2 + $0x178] sm:$0xff]
  %v1108 = vld [vmem:[%s2 + $0x180] sm:$0xff]
  %v1109 = vld [vmem:[%s2 + $0x188] sm:$0xff]
  %v1110 = vld [vmem:[%s2 + $0x190] sm:$0xff]
  %v1111 = vld [vmem:[%s2 + $0x198] sm:$0xff]
  %v1112 = vld [vmem:[%s2 + $0x1a0] sm:$0xff]
  %v1113 = vld [vmem:[%s2 + $0x1a8] sm:$0xff]
  %v1114 = vld [vmem:[%s2 + $0x1b0] sm:$0xff]
  %v1115 = vld [vmem:[%s2 + $0x1b8] sm:$0xff]
  %v1116 = vld [vmem:[%s2 + $0x1c0] sm:$0xff]
  %v1117 = vld [vmem:[%s2 + $0x1c8] sm:$0xff]
  %v1118 = vld [vmem:[%s2 + $0x1d0] sm:$0xff]
  %v1119 = vld [vmem:[%s2 + $0x1d8] sm:$0xff]
  %v1120 = vld [vmem:[%s2 + $0x1e0] sm:$0xff]
  %v1121 = vld [vmem:[%s2 + $0x1e8] sm:$0xff]
  %v1122 = vld [vmem:[%s2 + $0x1f0] sm:$0xff]
  %v1123 = vld [vmem:[%s2 + $0x1f8] sm:$0xff]
  %1124 = vmatprep.subr.mxu0 0.0
  %1125 = vmatpush1.msra.mxu0 %v95
  %1126 = vmatprep.subr.mxu0 0.0
  %1127 = vmatpush1.msra.mxu0 %v94
  %1128 = vmatprep.subr.mxu0 0.0
  %1129 = vmatpush1.msra.mxu0 %v93
  %1130 = vmatprep.subr.mxu0 0.0
  %1131 = vmatpush1.msra.mxu0 %v92
  %1132 = vmatprep.subr.mxu0 0.0
  %1133 = vmatpush1.msra.mxu0 %v91
  %1134 = vmatprep.subr.mxu0 0.0
  %1135 = vmatpush1.msra.mxu0 %v90
  %1136 = vmatprep.subr.mxu0 0.0
  %1137 = vmatpush1.msra.mxu0 %v89
  %1138 = vmatprep.subr.mxu0 0.0
  %1139 = vmatpush1.msra.mxu0 %v88
  %1140 = vmatprep.subr.mxu0 0.0
  %1141 = vmatpush1.msra.mxu0 %v87
  %1142 = vmatprep.subr.mxu0 0.0
  %1143 = vmatpush1.msra.mxu0 %v86
  %1144 = vmatprep.subr.mxu0 0.0
  %1145 = vmatpush1.msra.mxu0 %v85
  %1146 = vmatprep.subr.mxu0 0.0
  %1147 = vmatpush1.msra.mxu0 %v84
  %1148 = vmatprep.subr.mxu0 0.0
  %1149 = vmatpush1.msra.mxu0 %v83
  %1150 = vmatprep.subr.mxu0 0.0
  %1151 = vmatpush1.msra.mxu0 %v82
  %1152 = vmatprep.subr.mxu0 0.0
  %1153 = vmatpush1.msra.mxu0 %v81
  %1154 = vmatprep.subr.mxu0 0.0
  %1155 = vmatpush1.msra.mxu0 %v80
  %1156 = vmatprep.subr.mxu0 0.0
  %1157 = vmatpush2.msra.mxu0 %v111
  %1158 = vmatprep.subr.mxu0 0.0
  %1159 = vmatpush2.msra.mxu0 %v110
  %1160 = vmatprep.subr.mxu0 0.0
  %1161 = vmatpush2.msra.mxu0 %v109
  %1162 = vmatprep.subr.mxu0 0.0
  %1163 = vmatpush2.msra.mxu0 %v108
  %1164 = vmatprep.subr.mxu0 0.0
  %1165 = vmatpush2.msra.mxu0 %v107
  %1166 = vmatprep.subr.mxu0 0.0
  %1167 = vmatpush2.msra.mxu0 %v106
  %1168 = vmatprep.subr.mxu0 0.0
  %1169 = vmatpush2.msra.mxu0 %v105
  %1170 = vmatprep.subr.mxu0 0.0
  %1171 = vmatpush2.msra.mxu0 %v104
  %1172 = vmatprep.subr.mxu0 0.0
  %1173 = vmatpush2.msra.mxu0 %v103
  %1174 = vmatprep.subr.mxu0 0.0
  %1175 = vmatpush2.msra.mxu0 %v102
  %1176 = vmatprep.subr.mxu0 0.0
  %1177 = vmatpush2.msra.mxu0 %v101
  %1178 = vmatprep.subr.mxu0 0.0
  %1179 = vmatpush2.msra.mxu0 %v100
  %1180 = vmatprep.subr.mxu0 0.0
  %1181 = vmatpush2.msra.mxu0 %v99
  %1182 = vmatprep.subr.mxu0 0.0
  %1183 = vmatpush2.msra.mxu0 %v98
  %1184 = vmatprep.subr.mxu0 0.0
  %1185 = vmatpush2.msra.mxu0 %v97
  %1186 = vmatprep.subr.mxu0 0.0
  %1187 = vmatpush2.msra.mxu0 %v96
  %1188 = vmatprep.mubr.f32.mxu0 %v805
  %1189 = vmatmul.mubr.f32.gmra.mxu0 %v804
  %v1190 = vpop.f32.mrf.mxu0
  %v1191 = vadd.f32 0.0, %v1190
  %v1192 = vpop.f32.mrf.mxu0
  %1193 = vmatprep.mubr.f32.mxu0 %v809
  %1194 = vmatmul.mubr.f32.gmra.mxu0 %v808
  %v1195 = vpop.f32.mrf.mxu0
  %v1196 = vadd.f32 0.0, %v1195
  %v1197 = vpop.f32.mrf.mxu0
  %1198 = vmatprep.mubr.f32.mxu0 %v813
  %1199 = vmatmul.mubr.f32.gmra.mxu0 %v812
  %v1200 = vpop.f32.mrf.mxu0
  %v1201 = vadd.f32 0.0, %v1200
  %v1202 = vpop.f32.mrf.mxu0
  %1203 = vmatprep.mubr.f32.mxu0 %v817
  %1204 = vmatmul.mubr.f32.gmra.mxu0 %v816
  %v1205 = vpop.f32.mrf.mxu0
  %v1206 = vadd.f32 0.0, %v1205
  %v1207 = vpop.f32.mrf.mxu0
  %1208 = vmatprep.mubr.f32.mxu0 %v821
  %1209 = vmatmul.mubr.f32.gmra.mxu0 %v820
  %v1210 = vpop.f32.mrf.mxu0
  %v1211 = vadd.f32 0.0, %v1210
  %v1212 = vpop.f32.mrf.mxu0
  %1213 = vmatprep.mubr.f32.mxu0 %v825
  %1214 = vmatmul.mubr.f32.gmra.mxu0 %v824
  %v1215 = vpop.f32.mrf.mxu0
  %v1216 = vadd.f32 0.0, %v1215
  %v1217 = vpop.f32.mrf.mxu0
  %1218 = vmatprep.mubr.f32.mxu0 %v829
  %1219 = vmatmul.mubr.f32.gmra.mxu0 %v828
  %v1220 = vpop.f32.mrf.mxu0
  %v1221 = vadd.f32 0.0, %v1220
  %v1222 = vpop.f32.mrf.mxu0
  %1223 = vmatprep.mubr.f32.mxu0 %v833
  %1224 = vmatmul.mubr.f32.gmra.mxu0 %v832
  %v1225 = vpop.f32.mrf.mxu0
  %v1226 = vadd.f32 0.0, %v1225
  %v1227 = vpop.f32.mrf.mxu0
  %1228 = vmatprep.mubr.f32.mxu0 %v837
  %1229 = vmatmul.mubr.f32.gmra.mxu0 %v836
  %v1230 = vpop.f32.mrf.mxu0
  %v1231 = vadd.f32 0.0, %v1230
  %v1232 = vpop.f32.mrf.mxu0
  %1233 = vmatprep.mubr.f32.mxu0 %v841
  %1234 = vmatmul.mubr.f32.gmra.mxu0 %v840
  %v1235 = vpop.f32.mrf.mxu0
  %v1236 = vadd.f32 0.0, %v1235
  %v1237 = vpop.f32.mrf.mxu0
  %1238 = vmatprep.mubr.f32.mxu0 %v845
  %1239 = vmatmul.mubr.f32.gmra.mxu0 %v844
  %v1240 = vpop.f32.mrf.mxu0
  %v1241 = vadd.f32 0.0, %v1240
  %v1242 = vpop.f32.mrf.mxu0
  %1243 = vmatprep.mubr.f32.mxu0 %v849
  %1244 = vmatmul.mubr.f32.gmra.mxu0 %v848
  %v1245 = vpop.f32.mrf.mxu0
  %v1246 = vadd.f32 0.0, %v1245
  %v1247 = vpop.f32.mrf.mxu0
  %1248 = vmatprep.mubr.f32.mxu0 %v853
  %1249 = vmatmul.mubr.f32.gmra.mxu0 %v852
  %v1250 = vpop.f32.mrf.mxu0
  %v1251 = vadd.f32 0.0, %v1250
  %v1252 = vpop.f32.mrf.mxu0
  %1253 = vmatprep.mubr.f32.mxu0 %v857
  %1254 = vmatmul.mubr.f32.gmra.mxu0 %v856
  %v1255 = vpop.f32.mrf.mxu0
  %v1256 = vadd.f32 0.0, %v1255
  %v1257 = vpop.f32.mrf.mxu0
  %1258 = vmatprep.mubr.f32.mxu0 %v861
  %1259 = vmatmul.mubr.f32.gmra.mxu0 %v860
  %v1260 = vpop.f32.mrf.mxu0
  %v1261 = vadd.f32 0.0, %v1260
  %v1262 = vpop.f32.mrf.mxu0
  %1263 = vmatprep.mubr.f32.mxu0 %v865
  %1264 = vmatmul.mubr.f32.gmra.mxu0 %v864
  %v1265 = vpop.f32.mrf.mxu0
  %v1266 = vadd.f32 0.0, %v1265
  %v1267 = vpop.f32.mrf.mxu0
  %1268 = vmatprep.mubr.f32.mxu0 %v869
  %1269 = vmatmul.mubr.f32.gmra.mxu0 %v868
  %v1270 = vpop.f32.mrf.mxu0
  %v1271 = vadd.f32 0.0, %v1270
  %v1272 = vpop.f32.mrf.mxu0
  %1273 = vmatprep.mubr.f32.mxu0 %v873
  %1274 = vmatmul.mubr.f32.gmra.mxu0 %v872
  %v1275 = vpop.f32.mrf.mxu0
  %v1276 = vadd.f32 0.0, %v1275
  %v1277 = vpop.f32.mrf.mxu0
  %1278 = vmatprep.mubr.f32.mxu0 %v877
  %1279 = vmatmul.mubr.f32.gmra.mxu0 %v876
  %v1280 = vpop.f32.mrf.mxu0
  %v1281 = vadd.f32 0.0, %v1280
  %v1282 = vpop.f32.mrf.mxu0
  %1283 = vmatprep.mubr.f32.mxu0 %v881
  %1284 = vmatmul.mubr.f32.gmra.mxu0 %v880
  %v1285 = vpop.f32.mrf.mxu0
  %v1286 = vadd.f32 0.0, %v1285
  %v1287 = vpop.f32.mrf.mxu0
  %1288 = vmatprep.mubr.f32.mxu0 %v885
  %1289 = vmatmul.mubr.f32.gmra.mxu0 %v884
  %v1290 = vpop.f32.mrf.mxu0
  %v1291 = vadd.f32 0.0, %v1290
  %v1292 = vpop.f32.mrf.mxu0
  %1293 = vmatprep.mubr.f32.mxu0 %v889
  %1294 = vmatmul.mubr.f32.gmra.mxu0 %v888
  %v1295 = vpop.f32.mrf.mxu0
  %v1296 = vadd.f32 0.0, %v1295
  %v1297 = vpop.f32.mrf.mxu0
  %1298 = vmatprep.mubr.f32.mxu0 %v893
  %1299 = vmatmul.mubr.f32.gmra.mxu0 %v892
  %v1300 = vpop.f32.mrf.mxu0
  %v1301 = vadd.f32 0.0, %v1300
  %v1302 = vpop.f32.mrf.mxu0
  %1303 = vmatprep.mubr.f32.mxu0 %v897
  %1304 = vmatmul.mubr.f32.gmra.mxu0 %v896
  %v1305 = vpop.f32.mrf.mxu0
  %v1306 = vadd.f32 0.0, %v1305
  %v1307 = vpop.f32.mrf.mxu0
  %1308 = vmatprep.mubr.f32.mxu0 %v901
  %1309 = vmatmul.mubr.f32.gmra.mxu0 %v900
  %v1310 = vpop.f32.mrf.mxu0
  %v1311 = vadd.f32 0.0, %v1310
  %v1312 = vpop.f32.mrf.mxu0
  %1313 = vmatprep.mubr.f32.mxu0 %v905
  %1314 = vmatmul.mubr.f32.gmra.mxu0 %v904
  %v1315 = vpop.f32.mrf.mxu0
  %v1316 = vadd.f32 0.0, %v1315
  %v1317 = vpop.f32.mrf.mxu0
  %1318 = vmatprep.mubr.f32.mxu0 %v909
  %1319 = vmatmul.mubr.f32.gmra.mxu0 %v908
  %v1320 = vpop.f32.mrf.mxu0
  %v1321 = vadd.f32 0.0, %v1320
  %v1322 = vpop.f32.mrf.mxu0
  %1323 = vmatprep.mubr.f32.mxu0 %v913
  %1324 = vmatmul.mubr.f32.gmra.mxu0 %v912
  %v1325 = vpop.f32.mrf.mxu0
  %v1326 = vadd.f32 0.0, %v1325
  %v1327 = vpop.f32.mrf.mxu0
  %1328 = vmatprep.mubr.f32.mxu0 %v917
  %1329 = vmatmul.mubr.f32.gmra.mxu0 %v916
  %v1330 = vpop.f32.mrf.mxu0
  %v1331 = vadd.f32 0.0, %v1330
  %v1332 = vpop.f32.mrf.mxu0
  %1333 = vmatprep.mubr.f32.mxu0 %v921
  %1334 = vmatmul.mubr.f32.gmra.mxu0 %v920
  %v1335 = vpop.f32.mrf.mxu0
  %v1336 = vadd.f32 0.0, %v1335
  %v1337 = vpop.f32.mrf.mxu0
  %1338 = vmatprep.mubr.f32.mxu0 %v925
  %1339 = vmatmul.mubr.f32.gmra.mxu0 %v924
  %v1340 = vpop.f32.mrf.mxu0
  %v1341 = vadd.f32 0.0, %v1340
  %v1342 = vpop.f32.mrf.mxu0
  %1343 = vmatprep.mubr.f32.mxu0 %v929
  %1344 = vmatmul.mubr.f32.gmra.mxu0 %v928
  %v1345 = vpop.f32.mrf.mxu0
  %v1346 = vadd.f32 0.0, %v1345
  %v1347 = vpop.f32.mrf.mxu0
  %1348 = vmatprep.mubr.f32.mxu0 %v933
  %1349 = vmatmul.mubr.f32.gmra.mxu0 %v932
  %v1350 = vpop.f32.mrf.mxu0
  %v1351 = vadd.f32 0.0, %v1350
  %v1352 = vpop.f32.mrf.mxu0
  %1353 = vmatprep.mubr.f32.mxu0 %v937
  %1354 = vmatmul.mubr.f32.gmra.mxu0 %v936
  %v1355 = vpop.f32.mrf.mxu0
  %v1356 = vadd.f32 0.0, %v1355
  %v1357 = vpop.f32.mrf.mxu0
  %1358 = vmatprep.mubr.f32.mxu0 %v941
  %1359 = vmatmul.mubr.f32.gmra.mxu0 %v940
  %v1360 = vpop.f32.mrf.mxu0
  %v1361 = vadd.f32 0.0, %v1360
  %v1362 = vpop.f32.mrf.mxu0
  %1363 = vmatprep.mubr.f32.mxu0 %v945
  %1364 = vmatmul.mubr.f32.gmra.mxu0 %v944
  %v1365 = vpop.f32.mrf.mxu0
  %v1366 = vadd.f32 0.0, %v1365
  %v1367 = vpop.f32.mrf.mxu0
  %1368 = vmatprep.mubr.f32.mxu0 %v949
  %1369 = vmatmul.mubr.f32.gmra.mxu0 %v948
  %v1370 = vpop.f32.mrf.mxu0
  %v1371 = vadd.f32 0.0, %v1370
  %v1372 = vpop.f32.mrf.mxu0
  %1373 = vmatprep.mubr.f32.mxu0 %v953
  %1374 = vmatmul.mubr.f32.gmra.mxu0 %v952
  %v1375 = vpop.f32.mrf.mxu0
  %v1376 = vadd.f32 0.0, %v1375
  %v1377 = vpop.f32.mrf.mxu0
  %1378 = vmatprep.mubr.f32.mxu0 %v957
  %1379 = vmatmul.mubr.f32.gmra.mxu0 %v956
  %v1380 = vpop.f32.mrf.mxu0
  %v1381 = vadd.f32 0.0, %v1380
  %v1382 = vpop.f32.mrf.mxu0
  %1383 = vmatprep.mubr.f32.mxu0 %v961
  %1384 = vmatmul.mubr.f32.gmra.mxu0 %v960
  %v1385 = vpop.f32.mrf.mxu0
  %v1386 = vadd.f32 0.0, %v1385
  %v1387 = vpop.f32.mrf.mxu0
  %1388 = vmatprep.mubr.f32.mxu0 %v965
  %1389 = vmatmul.mubr.f32.gmra.mxu0 %v964
  %v1390 = vpop.f32.mrf.mxu0
  %v1391 = vadd.f32 0.0, %v1390
  %v1392 = vpop.f32.mrf.mxu0
  %1393 = vmatprep.mubr.f32.mxu0 %v969
  %1394 = vmatmul.mubr.f32.gmra.mxu0 %v968
  %v1395 = vpop.f32.mrf.mxu0
  %v1396 = vadd.f32 0.0, %v1395
  %v1397 = vpop.f32.mrf.mxu0
  %1398 = vmatprep.mubr.f32.mxu0 %v973
  %1399 = vmatmul.mubr.f32.gmra.mxu0 %v972
  %v1400 = vpop.f32.mrf.mxu0
  %v1401 = vadd.f32 0.0, %v1400
  %v1402 = vpop.f32.mrf.mxu0
  %1403 = vmatprep.mubr.f32.mxu0 %v977
  %1404 = vmatmul.mubr.f32.gmra.mxu0 %v976
  %v1405 = vpop.f32.mrf.mxu0
  %v1406 = vadd.f32 0.0, %v1405
  %v1407 = vpop.f32.mrf.mxu0
  %1408 = vmatprep.mubr.f32.mxu0 %v981
  %1409 = vmatmul.mubr.f32.gmra.mxu0 %v980
  %v1410 = vpop.f32.mrf.mxu0
  %v1411 = vadd.f32 0.0, %v1410
  %v1412 = vpop.f32.mrf.mxu0
  %1413 = vmatprep.mubr.f32.mxu0 %v985
  %1414 = vmatmul.mubr.f32.gmra.mxu0 %v984
  %v1415 = vpop.f32.mrf.mxu0
  %v1416 = vadd.f32 0.0, %v1415
  %v1417 = vpop.f32.mrf.mxu0
  %1418 = vmatprep.mubr.f32.mxu0 %v989
  %1419 = vmatmul.mubr.f32.gmra.mxu0 %v988
  %v1420 = vpop.f32.mrf.mxu0
  %v1421 = vadd.f32 0.0, %v1420
  %v1422 = vpop.f32.mrf.mxu0
  %1423 = vmatprep.mubr.f32.mxu0 %v993
  %1424 = vmatmul.mubr.f32.gmra.mxu0 %v992
  %v1425 = vpop.f32.mrf.mxu0
  %v1426 = vadd.f32 0.0, %v1425
  %v1427 = vpop.f32.mrf.mxu0
  %1428 = vmatprep.mubr.f32.mxu0 %v997
  %1429 = vmatmul.mubr.f32.gmra.mxu0 %v996
  %v1430 = vpop.f32.mrf.mxu0
  %v1431 = vadd.f32 0.0, %v1430
  %v1432 = vpop.f32.mrf.mxu0
  %1433 = vmatprep.mubr.f32.mxu0 %v1001
  %1434 = vmatmul.mubr.f32.gmra.mxu0 %v1000
  %v1435 = vpop.f32.mrf.mxu0
  %v1436 = vadd.f32 0.0, %v1435
  %v1437 = vpop.f32.mrf.mxu0
  %1438 = vmatprep.mubr.f32.mxu0 %v1005
  %1439 = vmatmul.mubr.f32.gmra.mxu0 %v1004
  %v1440 = vpop.f32.mrf.mxu0
  %v1441 = vadd.f32 0.0, %v1440
  %v1442 = vpop.f32.mrf.mxu0
  %1443 = vmatprep.mubr.f32.mxu0 %v1009
  %1444 = vmatmul.mubr.f32.gmra.mxu0 %v1008
  %v1445 = vpop.f32.mrf.mxu0
  %v1446 = vadd.f32 0.0, %v1445
  %v1447 = vpop.f32.mrf.mxu0
  %1448 = vmatprep.mubr.f32.mxu0 %v1013
  %1449 = vmatmul.mubr.f32.gmra.mxu0 %v1012
  %v1450 = vpop.f32.mrf.mxu0
  %v1451 = vadd.f32 0.0, %v1450
  %v1452 = vpop.f32.mrf.mxu0
  %1453 = vmatprep.mubr.f32.mxu0 %v1017
  %1454 = vmatmul.mubr.f32.gmra.mxu0 %v1016
  %v1455 = vpop.f32.mrf.mxu0
  %v1456 = vadd.f32 0.0, %v1455
  %v1457 = vpop.f32.mrf.mxu0
  %1458 = vmatprep.mubr.f32.mxu0 %v1021
  %1459 = vmatmul.mubr.f32.gmra.mxu0 %v1020
  %v1460 = vpop.f32.mrf.mxu0
  %v1461 = vadd.f32 0.0, %v1460
  %v1462 = vpop.f32.mrf.mxu0
  %1463 = vmatprep.mubr.f32.mxu0 %v1025
  %1464 = vmatmul.mubr.f32.gmra.mxu0 %v1024
  %v1465 = vpop.f32.mrf.mxu0
  %v1466 = vadd.f32 0.0, %v1465
  %v1467 = vpop.f32.mrf.mxu0
  %1468 = vmatprep.mubr.f32.mxu0 %v1029
  %1469 = vmatmul.mubr.f32.gmra.mxu0 %v1028
  %v1470 = vpop.f32.mrf.mxu0
  %v1471 = vadd.f32 0.0, %v1470
  %v1472 = vpop.f32.mrf.mxu0
  %1473 = vmatprep.mubr.f32.mxu0 %v1033
  %1474 = vmatmul.mubr.f32.gmra.mxu0 %v1032
  %v1475 = vpop.f32.mrf.mxu0
  %v1476 = vadd.f32 0.0, %v1475
  %v1477 = vpop.f32.mrf.mxu0
  %1478 = vmatprep.mubr.f32.mxu0 %v1037
  %1479 = vmatmul.mubr.f32.gmra.mxu0 %v1036
  %v1480 = vpop.f32.mrf.mxu0
  %v1481 = vadd.f32 0.0, %v1480
  %v1482 = vpop.f32.mrf.mxu0
  %1483 = vmatprep.mubr.f32.mxu0 %v1041
  %1484 = vmatmul.mubr.f32.gmra.mxu0 %v1040
  %v1485 = vpop.f32.mrf.mxu0
  %v1486 = vadd.f32 0.0, %v1485
  %v1487 = vpop.f32.mrf.mxu0
  %1488 = vmatprep.mubr.f32.mxu0 %v1045
  %1489 = vmatmul.mubr.f32.gmra.mxu0 %v1044
  %v1490 = vpop.f32.mrf.mxu0
  %v1491 = vadd.f32 0.0, %v1490
  %v1492 = vpop.f32.mrf.mxu0
  %1493 = vmatprep.mubr.f32.mxu0 %v1049
  %1494 = vmatmul.mubr.f32.gmra.mxu0 %v1048
  %v1495 = vpop.f32.mrf.mxu0
  %v1496 = vadd.f32 0.0, %v1495
  %v1497 = vpop.f32.mrf.mxu0
  %1498 = vmatprep.mubr.f32.mxu0 %v1053
  %1499 = vmatmul.mubr.f32.gmra.mxu0 %v1052
  %v1500 = vpop.f32.mrf.mxu0
  %v1501 = vadd.f32 0.0, %v1500
  %v1502 = vpop.f32.mrf.mxu0
  %1503 = vmatprep.mubr.f32.mxu0 %v1057
  %1504 = vmatmul.mubr.f32.gmra.mxu0 %v1056
  %v1505 = vpop.f32.mrf.mxu0
  %v1506 = vadd.f32 0.0, %v1505
  %v1507 = vpop.f32.mrf.mxu0
  %1508 = vdwg.mxu0
  %1509 = vmatprep.subr.mxu0 0.0
  %1510 = vmatpush1.msra.mxu0 %v127
  %1511 = vmatprep.subr.mxu0 0.0
  %1512 = vmatpush1.msra.mxu0 %v126
  %1513 = vmatprep.subr.mxu0 0.0
  %1514 = vmatpush1.msra.mxu0 %v125
  %1515 = vmatprep.subr.mxu0 0.0
  %1516 = vmatpush1.msra.mxu0 %v124
  %1517 = vmatprep.subr.mxu0 0.0
  %1518 = vmatpush1.msra.mxu0 %v123
  %1519 = vmatprep.subr.mxu0 0.0
  %1520 = vmatpush1.msra.mxu0 %v122
  %1521 = vmatprep.subr.mxu0 0.0
  %1522 = vmatpush1.msra.mxu0 %v121
  %1523 = vmatprep.subr.mxu0 0.0
  %1524 = vmatpush1.msra.mxu0 %v120
  %1525 = vmatprep.subr.mxu0 0.0
  %1526 = vmatpush1.msra.mxu0 %v119
  %1527 = vmatprep.subr.mxu0 0.0
  %1528 = vmatpush1.msra.mxu0 %v118
  %1529 = vmatprep.subr.mxu0 0.0
  %1530 = vmatpush1.msra.mxu0 %v117
  %1531 = vmatprep.subr.mxu0 0.0
  %1532 = vmatpush1.msra.mxu0 %v116
  %1533 = vmatprep.subr.mxu0 0.0
  %1534 = vmatpush1.msra.mxu0 %v115
  %1535 = vmatprep.subr.mxu0 0.0
  %1536 = vmatpush1.msra.mxu0 %v114
  %1537 = vmatprep.subr.mxu0 0.0
  %1538 = vmatpush1.msra.mxu0 %v113
  %1539 = vmatprep.subr.mxu0 0.0
  %1540 = vmatpush1.msra.mxu0 %v112
  %1541 = vmatprep.subr.mxu0 0.0
  %1542 = vmatpush2.msra.mxu0 %v143
  %1543 = vmatprep.subr.mxu0 0.0
  %1544 = vmatpush2.msra.mxu0 %v142
  %1545 = vmatprep.subr.mxu0 0.0
  %1546 = vmatpush2.msra.mxu0 %v141
  %1547 = vmatprep.subr.mxu0 0.0
  %1548 = vmatpush2.msra.mxu0 %v140
  %1549 = vmatprep.subr.mxu0 0.0
  %1550 = vmatpush2.msra.mxu0 %v139
  %1551 = vmatprep.subr.mxu0 0.0
  %1552 = vmatpush2.msra.mxu0 %v138
  %1553 = vmatprep.subr.mxu0 0.0
  %1554 = vmatpush2.msra.mxu0 %v137
  %1555 = vmatprep.subr.mxu0 0.0
  %1556 = vmatpush2.msra.mxu0 %v136
  %1557 = vmatprep.subr.mxu0 0.0
  %1558 = vmatpush2.msra.mxu0 %v135
  %1559 = vmatprep.subr.mxu0 0.0
  %1560 = vmatpush2.msra.mxu0 %v134
  %1561 = vmatprep.subr.mxu0 0.0
  %1562 = vmatpush2.msra.mxu0 %v133
  %1563 = vmatprep.subr.mxu0 0.0
  %1564 = vmatpush2.msra.mxu0 %v132
  %1565 = vmatprep.subr.mxu0 0.0
  %1566 = vmatpush2.msra.mxu0 %v131
  %1567 = vmatprep.subr.mxu0 0.0
  %1568 = vmatpush2.msra.mxu0 %v130
  %1569 = vmatprep.subr.mxu0 0.0
  %1570 = vmatpush2.msra.mxu0 %v129
  %1571 = vmatprep.subr.mxu0 0.0
  %1572 = vmatpush2.msra.mxu0 %v128
  %1573 = vmatprep.mubr.f32.mxu0 %v807
  %1574 = vmatmul.mubr.f32.gmra.mxu0 %v806
  %v1575 = vpop.f32.mrf.mxu0
  %v1576 = vadd.f32 %v1191, %v1575
  %v1577 = vpop.f32.mrf.mxu0
  %1578 = vmatprep.mubr.f32.mxu0 %v811
  %1579 = vmatmul.mubr.f32.gmra.mxu0 %v810
  %v1580 = vpop.f32.mrf.mxu0
  %v1581 = vadd.f32 %v1196, %v1580
  %v1582 = vpop.f32.mrf.mxu0
  %1583 = vmatprep.mubr.f32.mxu0 %v815
  %1584 = vmatmul.mubr.f32.gmra.mxu0 %v814
  %v1585 = vpop.f32.mrf.mxu0
  %v1586 = vadd.f32 %v1201, %v1585
  %v1587 = vpop.f32.mrf.mxu0
  %1588 = vmatprep.mubr.f32.mxu0 %v819
  %1589 = vmatmul.mubr.f32.gmra.mxu0 %v818
  %v1590 = vpop.f32.mrf.mxu0
  %v1591 = vadd.f32 %v1206, %v1590
  %v1592 = vpop.f32.mrf.mxu0
  %1593 = vmatprep.mubr.f32.mxu0 %v823
  %1594 = vmatmul.mubr.f32.gmra.mxu0 %v822
  %v1595 = vpop.f32.mrf.mxu0
  %v1596 = vadd.f32 %v1211, %v1595
  %v1597 = vpop.f32.mrf.mxu0
  %1598 = vmatprep.mubr.f32.mxu0 %v827
  %1599 = vmatmul.mubr.f32.gmra.mxu0 %v826
  %v1600 = vpop.f32.mrf.mxu0
  %v1601 = vadd.f32 %v1216, %v1600
  %v1602 = vpop.f32.mrf.mxu0
  %1603 = vmatprep.mubr.f32.mxu0 %v831
  %1604 = vmatmul.mubr.f32.gmra.mxu0 %v830
  %v1605 = vpop.f32.mrf.mxu0
  %v1606 = vadd.f32 %v1221, %v1605
  %v1607 = vpop.f32.mrf.mxu0
  %1608 = vmatprep.mubr.f32.mxu0 %v835
  %1609 = vmatmul.mubr.f32.gmra.mxu0 %v834
  %v1610 = vpop.f32.mrf.mxu0
  %v1611 = vadd.f32 %v1226, %v1610
  %v1612 = vpop.f32.mrf.mxu0
  %1613 = vmatprep.mubr.f32.mxu0 %v839
  %1614 = vmatmul.mubr.f32.gmra.mxu0 %v838
  %v1615 = vpop.f32.mrf.mxu0
  %v1616 = vadd.f32 %v1231, %v1615
  %v1617 = vpop.f32.mrf.mxu0
  %1618 = vmatprep.mubr.f32.mxu0 %v843
  %1619 = vmatmul.mubr.f32.gmra.mxu0 %v842
  %v1620 = vpop.f32.mrf.mxu0
  %v1621 = vadd.f32 %v1236, %v1620
  %v1622 = vpop.f32.mrf.mxu0
  %1623 = vmatprep.mubr.f32.mxu0 %v847
  %1624 = vmatmul.mubr.f32.gmra.mxu0 %v846
  %v1625 = vpop.f32.mrf.mxu0
  %v1626 = vadd.f32 %v1241, %v1625
  %v1627 = vpop.f32.mrf.mxu0
  %1628 = vmatprep.mubr.f32.mxu0 %v851
  %1629 = vmatmul.mubr.f32.gmra.mxu0 %v850
  %v1630 = vpop.f32.mrf.mxu0
  %v1631 = vadd.f32 %v1246, %v1630
  %v1632 = vpop.f32.mrf.mxu0
  %1633 = vmatprep.mubr.f32.mxu0 %v855
  %1634 = vmatmul.mubr.f32.gmra.mxu0 %v854
  %v1635 = vpop.f32.mrf.mxu0
  %v1636 = vadd.f32 %v1251, %v1635
  %v1637 = vpop.f32.mrf.mxu0
  %1638 = vmatprep.mubr.f32.mxu0 %v859
  %1639 = vmatmul.mubr.f32.gmra.mxu0 %v858
  %v1640 = vpop.f32.mrf.mxu0
  %v1641 = vadd.f32 %v1256, %v1640
  %v1642 = vpop.f32.mrf.mxu0
  %1643 = vmatprep.mubr.f32.mxu0 %v863
  %1644 = vmatmul.mubr.f32.gmra.mxu0 %v862
  %v1645 = vpop.f32.mrf.mxu0
  %v1646 = vadd.f32 %v1261, %v1645
  %v1647 = vpop.f32.mrf.mxu0
  %1648 = vmatprep.mubr.f32.mxu0 %v867
  %1649 = vmatmul.mubr.f32.gmra.mxu0 %v866
  %v1650 = vpop.f32.mrf.mxu0
  %v1651 = vadd.f32 %v1266, %v1650
  %v1652 = vpop.f32.mrf.mxu0
  %1653 = vmatprep.mubr.f32.mxu0 %v871
  %1654 = vmatmul.mubr.f32.gmra.mxu0 %v870
  %v1655 = vpop.f32.mrf.mxu0
  %v1656 = vadd.f32 %v1271, %v1655
  %v1657 = vpop.f32.mrf.mxu0
  %1658 = vmatprep.mubr.f32.mxu0 %v875
  %1659 = vmatmul.mubr.f32.gmra.mxu0 %v874
  %v1660 = vpop.f32.mrf.mxu0
  %v1661 = vadd.f32 %v1276, %v1660
  %v1662 = vpop.f32.mrf.mxu0
  %1663 = vmatprep.mubr.f32.mxu0 %v879
  %1664 = vmatmul.mubr.f32.gmra.mxu0 %v878
  %v1665 = vpop.f32.mrf.mxu0
  %v1666 = vadd.f32 %v1281, %v1665
  %v1667 = vpop.f32.mrf.mxu0
  %1668 = vmatprep.mubr.f32.mxu0 %v883
  %1669 = vmatmul.mubr.f32.gmra.mxu0 %v882
  %v1670 = vpop.f32.mrf.mxu0
  %v1671 = vadd.f32 %v1286, %v1670
  %v1672 = vpop.f32.mrf.mxu0
  %1673 = vmatprep.mubr.f32.mxu0 %v887
  %1674 = vmatmul.mubr.f32.gmra.mxu0 %v886
  %v1675 = vpop.f32.mrf.mxu0
  %v1676 = vadd.f32 %v1291, %v1675
  %v1677 = vpop.f32.mrf.mxu0
  %1678 = vmatprep.mubr.f32.mxu0 %v891
  %1679 = vmatmul.mubr.f32.gmra.mxu0 %v890
  %v1680 = vpop.f32.mrf.mxu0
  %v1681 = vadd.f32 %v1296, %v1680
  %v1682 = vpop.f32.mrf.mxu0
  %1683 = vmatprep.mubr.f32.mxu0 %v895
  %1684 = vmatmul.mubr.f32.gmra.mxu0 %v894
  %v1685 = vpop.f32.mrf.mxu0
  %v1686 = vadd.f32 %v1301, %v1685
  %v1687 = vpop.f32.mrf.mxu0
  %1688 = vmatprep.mubr.f32.mxu0 %v899
  %1689 = vmatmul.mubr.f32.gmra.mxu0 %v898
  %v1690 = vpop.f32.mrf.mxu0
  %v1691 = vadd.f32 %v1306, %v1690
  %v1692 = vpop.f32.mrf.mxu0
  %1693 = vmatprep.mubr.f32.mxu0 %v903
  %1694 = vmatmul.mubr.f32.gmra.mxu0 %v902
  %v1695 = vpop.f32.mrf.mxu0
  %v1696 = vadd.f32 %v1311, %v1695
  %v1697 = vpop.f32.mrf.mxu0
  %1698 = vmatprep.mubr.f32.mxu0 %v907
  %1699 = vmatmul.mubr.f32.gmra.mxu0 %v906
  %v1700 = vpop.f32.mrf.mxu0
  %v1701 = vadd.f32 %v1316, %v1700
  %v1702 = vpop.f32.mrf.mxu0
  %1703 = vmatprep.mubr.f32.mxu0 %v911
  %1704 = vmatmul.mubr.f32.gmra.mxu0 %v910
  %v1705 = vpop.f32.mrf.mxu0
  %v1706 = vadd.f32 %v1321, %v1705
  %v1707 = vpop.f32.mrf.mxu0
  %1708 = vmatprep.mubr.f32.mxu0 %v915
  %1709 = vmatmul.mubr.f32.gmra.mxu0 %v914
  %v1710 = vpop.f32.mrf.mxu0
  %v1711 = vadd.f32 %v1326, %v1710
  %v1712 = vpop.f32.mrf.mxu0
  %1713 = vmatprep.mubr.f32.mxu0 %v919
  %1714 = vmatmul.mubr.f32.gmra.mxu0 %v918
  %v1715 = vpop.f32.mrf.mxu0
  %v1716 = vadd.f32 %v1331, %v1715
  %v1717 = vpop.f32.mrf.mxu0
  %1718 = vmatprep.mubr.f32.mxu0 %v923
  %1719 = vmatmul.mubr.f32.gmra.mxu0 %v922
  %v1720 = vpop.f32.mrf.mxu0
  %v1721 = vadd.f32 %v1336, %v1720
  %v1722 = vpop.f32.mrf.mxu0
  %1723 = vmatprep.mubr.f32.mxu0 %v927
  %1724 = vmatmul.mubr.f32.gmra.mxu0 %v926
  %v1725 = vpop.f32.mrf.mxu0
  %v1726 = vadd.f32 %v1341, %v1725
  %v1727 = vpop.f32.mrf.mxu0
  %1728 = vmatprep.mubr.f32.mxu0 %v931
  %1729 = vmatmul.mubr.f32.gmra.mxu0 %v930
  %v1730 = vpop.f32.mrf.mxu0
  %v1731 = vadd.f32 %v1346, %v1730
  %v1732 = vpop.f32.mrf.mxu0
  %1733 = vmatprep.mubr.f32.mxu0 %v935
  %1734 = vmatmul.mubr.f32.gmra.mxu0 %v934
  %v1735 = vpop.f32.mrf.mxu0
  %v1736 = vadd.f32 %v1351, %v1735
  %v1737 = vpop.f32.mrf.mxu0
  %1738 = vmatprep.mubr.f32.mxu0 %v939
  %1739 = vmatmul.mubr.f32.gmra.mxu0 %v938
  %v1740 = vpop.f32.mrf.mxu0
  %v1741 = vadd.f32 %v1356, %v1740
  %v1742 = vpop.f32.mrf.mxu0
  %1743 = vmatprep.mubr.f32.mxu0 %v943
  %1744 = vmatmul.mubr.f32.gmra.mxu0 %v942
  %v1745 = vpop.f32.mrf.mxu0
  %v1746 = vadd.f32 %v1361, %v1745
  %v1747 = vpop.f32.mrf.mxu0
  %1748 = vmatprep.mubr.f32.mxu0 %v947
  %1749 = vmatmul.mubr.f32.gmra.mxu0 %v946
  %v1750 = vpop.f32.mrf.mxu0
  %v1751 = vadd.f32 %v1366, %v1750
  %v1752 = vpop.f32.mrf.mxu0
  %1753 = vmatprep.mubr.f32.mxu0 %v951
  %1754 = vmatmul.mubr.f32.gmra.mxu0 %v950
  %v1755 = vpop.f32.mrf.mxu0
  %v1756 = vadd.f32 %v1371, %v1755
  %v1757 = vpop.f32.mrf.mxu0
  %1758 = vmatprep.mubr.f32.mxu0 %v955
  %1759 = vmatmul.mubr.f32.gmra.mxu0 %v954
  %v1760 = vpop.f32.mrf.mxu0
  %v1761 = vadd.f32 %v1376, %v1760
  %v1762 = vpop.f32.mrf.mxu0
  %1763 = vmatprep.mubr.f32.mxu0 %v959
  %1764 = vmatmul.mubr.f32.gmra.mxu0 %v958
  %v1765 = vpop.f32.mrf.mxu0
  %v1766 = vadd.f32 %v1381, %v1765
  %v1767 = vpop.f32.mrf.mxu0
  %1768 = vmatprep.mubr.f32.mxu0 %v963
  %1769 = vmatmul.mubr.f32.gmra.mxu0 %v962
  %v1770 = vpop.f32.mrf.mxu0
  %v1771 = vadd.f32 %v1386, %v1770
  %v1772 = vpop.f32.mrf.mxu0
  %1773 = vmatprep.mubr.f32.mxu0 %v967
  %1774 = vmatmul.mubr.f32.gmra.mxu0 %v966
  %v1775 = vpop.f32.mrf.mxu0
  %v1776 = vadd.f32 %v1391, %v1775
  %v1777 = vpop.f32.mrf.mxu0
  %1778 = vmatprep.mubr.f32.mxu0 %v971
  %1779 = vmatmul.mubr.f32.gmra.mxu0 %v970
  %v1780 = vpop.f32.mrf.mxu0
  %v1781 = vadd.f32 %v1396, %v1780
  %v1782 = vpop.f32.mrf.mxu0
  %1783 = vmatprep.mubr.f32.mxu0 %v975
  %1784 = vmatmul.mubr.f32.gmra.mxu0 %v974
  %v1785 = vpop.f32.mrf.mxu0
  %v1786 = vadd.f32 %v1401, %v1785
  %v1787 = vpop.f32.mrf.mxu0
  %1788 = vmatprep.mubr.f32.mxu0 %v979
  %1789 = vmatmul.mubr.f32.gmra.mxu0 %v978
  %v1790 = vpop.f32.mrf.mxu0
  %v1791 = vadd.f32 %v1406, %v1790
  %v1792 = vpop.f32.mrf.mxu0
  %1793 = vmatprep.mubr.f32.mxu0 %v983
  %1794 = vmatmul.mubr.f32.gmra.mxu0 %v982
  %v1795 = vpop.f32.mrf.mxu0
  %v1796 = vadd.f32 %v1411, %v1795
  %v1797 = vpop.f32.mrf.mxu0
  %1798 = vmatprep.mubr.f32.mxu0 %v987
  %1799 = vmatmul.mubr.f32.gmra.mxu0 %v986
  %v1800 = vpop.f32.mrf.mxu0
  %v1801 = vadd.f32 %v1416, %v1800
  %v1802 = vpop.f32.mrf.mxu0
  %1803 = vmatprep.mubr.f32.mxu0 %v991
  %1804 = vmatmul.mubr.f32.gmra.mxu0 %v990
  %v1805 = vpop.f32.mrf.mxu0
  %v1806 = vadd.f32 %v1421, %v1805
  %v1807 = vpop.f32.mrf.mxu0
  %1808 = vmatprep.mubr.f32.mxu0 %v995
  %1809 = vmatmul.mubr.f32.gmra.mxu0 %v994
  %v1810 = vpop.f32.mrf.mxu0
  %v1811 = vadd.f32 %v1426, %v1810
  %v1812 = vpop.f32.mrf.mxu0
  %1813 = vmatprep.mubr.f32.mxu0 %v999
  %1814 = vmatmul.mubr.f32.gmra.mxu0 %v998
  %v1815 = vpop.f32.mrf.mxu0
  %v1816 = vadd.f32 %v1431, %v1815
  %v1817 = vpop.f32.mrf.mxu0
  %1818 = vmatprep.mubr.f32.mxu0 %v1003
  %1819 = vmatmul.mubr.f32.gmra.mxu0 %v1002
  %v1820 = vpop.f32.mrf.mxu0
  %v1821 = vadd.f32 %v1436, %v1820
  %v1822 = vpop.f32.mrf.mxu0
  %1823 = vmatprep.mubr.f32.mxu0 %v1007
  %1824 = vmatmul.mubr.f32.gmra.mxu0 %v1006
  %v1825 = vpop.f32.mrf.mxu0
  %v1826 = vadd.f32 %v1441, %v1825
  %v1827 = vpop.f32.mrf.mxu0
  %1828 = vmatprep.mubr.f32.mxu0 %v1011
  %1829 = vmatmul.mubr.f32.gmra.mxu0 %v1010
  %v1830 = vpop.f32.mrf.mxu0
  %v1831 = vadd.f32 %v1446, %v1830
  %v1832 = vpop.f32.mrf.mxu0
  %1833 = vmatprep.mubr.f32.mxu0 %v1015
  %1834 = vmatmul.mubr.f32.gmra.mxu0 %v1014
  %v1835 = vpop.f32.mrf.mxu0
  %v1836 = vadd.f32 %v1451, %v1835
  %v1837 = vpop.f32.mrf.mxu0
  %1838 = vmatprep.mubr.f32.mxu0 %v1019
  %1839 = vmatmul.mubr.f32.gmra.mxu0 %v1018
  %v1840 = vpop.f32.mrf.mxu0
  %v1841 = vadd.f32 %v1456, %v1840
  %v1842 = vpop.f32.mrf.mxu0
  %1843 = vmatprep.mubr.f32.mxu0 %v1023
  %1844 = vmatmul.mubr.f32.gmra.mxu0 %v1022
  %v1845 = vpop.f32.mrf.mxu0
  %v1846 = vadd.f32 %v1461, %v1845
  %v1847 = vpop.f32.mrf.mxu0
  %1848 = vmatprep.mubr.f32.mxu0 %v1027
  %1849 = vmatmul.mubr.f32.gmra.mxu0 %v1026
  %v1850 = vpop.f32.mrf.mxu0
  %v1851 = vadd.f32 %v1466, %v1850
  %v1852 = vpop.f32.mrf.mxu0
  %1853 = vmatprep.mubr.f32.mxu0 %v1031
  %1854 = vmatmul.mubr.f32.gmra.mxu0 %v1030
  %v1855 = vpop.f32.mrf.mxu0
  %v1856 = vadd.f32 %v1471, %v1855
  %v1857 = vpop.f32.mrf.mxu0
  %1858 = vmatprep.mubr.f32.mxu0 %v1035
  %1859 = vmatmul.mubr.f32.gmra.mxu0 %v1034
  %v1860 = vpop.f32.mrf.mxu0
  %v1861 = vadd.f32 %v1476, %v1860
  %v1862 = vpop.f32.mrf.mxu0
  %1863 = vmatprep.mubr.f32.mxu0 %v1039
  %1864 = vmatmul.mubr.f32.gmra.mxu0 %v1038
  %v1865 = vpop.f32.mrf.mxu0
  %v1866 = vadd.f32 %v1481, %v1865
  %v1867 = vpop.f32.mrf.mxu0
  %1868 = vmatprep.mubr.f32.mxu0 %v1043
  %1869 = vmatmul.mubr.f32.gmra.mxu0 %v1042
  %v1870 = vpop.f32.mrf.mxu0
  %v1871 = vadd.f32 %v1486, %v1870
  %v1872 = vpop.f32.mrf.mxu0
  %1873 = vmatprep.mubr.f32.mxu0 %v1047
  %1874 = vmatmul.mubr.f32.gmra.mxu0 %v1046
  %v1875 = vpop.f32.mrf.mxu0
  %v1876 = vadd.f32 %v1491, %v1875
  %v1877 = vpop.f32.mrf.mxu0
  %1878 = vmatprep.mubr.f32.mxu0 %v1051
  %1879 = vmatmul.mubr.f32.gmra.mxu0 %v1050
  %v1880 = vpop.f32.mrf.mxu0
  %v1881 = vadd.f32 %v1496, %v1880
  %v1882 = vpop.f32.mrf.mxu0
  %1883 = vmatprep.mubr.f32.mxu0 %v1055
  %1884 = vmatmul.mubr.f32.gmra.mxu0 %v1054
  %v1885 = vpop.f32.mrf.mxu0
  %v1886 = vadd.f32 %v1501, %v1885
  %v1887 = vpop.f32.mrf.mxu0
  %1888 = vmatprep.mubr.f32.mxu0 %v1059
  %1889 = vmatmul.mubr.f32.gmra.mxu0 %v1058
  %v1890 = vpop.f32.mrf.mxu0
  %v1891 = vadd.f32 %v1506, %v1890
  %v1892 = vpop.f32.mrf.mxu0
  %1893 = vdwg.mxu0
  %v1894 = vadd.f32 %v1060, %v1576
  %v1895 = vadd.f32 %v1061, %v1581
  %v1896 = vadd.f32 %v1062, %v1586
  %v1897 = vadd.f32 %v1063, %v1591
  %v1898 = vadd.f32 %v1064, %v1596
  %v1899 = vadd.f32 %v1065, %v1601
  %v1900 = vadd.f32 %v1066, %v1606
  %v1901 = vadd.f32 %v1067, %v1611
  %v1902 = vadd.f32 %v1068, %v1616
  %v1903 = vadd.f32 %v1069, %v1621
  %v1904 = vadd.f32 %v1070, %v1626
  %v1905 = vadd.f32 %v1071, %v1631
  %v1906 = vadd.f32 %v1072, %v1636
  %v1907 = vadd.f32 %v1073, %v1641
  %v1908 = vadd.f32 %v1074, %v1646
  %v1909 = vadd.f32 %v1075, %v1651
  %v1910 = vadd.f32 %v1076, %v1656
  %v1911 = vadd.f32 %v1077, %v1661
  %v1912 = vadd.f32 %v1078, %v1666
  %v1913 = vadd.f32 %v1079, %v1671
  %v1914 = vadd.f32 %v1080, %v1676
  %v1915 = vadd.f32 %v1081, %v1681
  %v1916 = vadd.f32 %v1082, %v1686
  %v1917 = vadd.f32 %v1083, %v1691
  %v1918 = vadd.f32 %v1084, %v1696
  %v1919 = vadd.f32 %v1085, %v1701
  %v1920 = vadd.f32 %v1086, %v1706
  %v1921 = vadd.f32 %v1087, %v1711
  %v1922 = vadd.f32 %v1088, %v1716
  %v1923 = vadd.f32 %v1089, %v1721
  %v1924 = vadd.f32 %v1090, %v1726
  %v1925 = vadd.f32 %v1091, %v1731
  %v1926 = vadd.f32 %v1092, %v1736
  %v1927 = vadd.f32 %v1093, %v1741
  %v1928 = vadd.f32 %v1094, %v1746
  %v1929 = vadd.f32 %v1095, %v1751
  %v1930 = vadd.f32 %v1096, %v1756
  %v1931 = vadd.f32 %v1097, %v1761
  %v1932 = vadd.f32 %v1098, %v1766
  %v1933 = vadd.f32 %v1099, %v1771
  %v1934 = vadd.f32 %v1100, %v1776
  %v1935 = vadd.f32 %v1101, %v1781
  %v1936 = vadd.f32 %v1102, %v1786
  %v1937 = vadd.f32 %v1103, %v1791
  %v1938 = vadd.f32 %v1104, %v1796
  %v1939 = vadd.f32 %v1105, %v1801
  %v1940 = vadd.f32 %v1106, %v1806
  %v1941 = vadd.f32 %v1107, %v1811
  %v1942 = vadd.f32 %v1108, %v1816
  %v1943 = vadd.f32 %v1109, %v1821
  %v1944 = vadd.f32 %v1110, %v1826
  %v1945 = vadd.f32 %v1111, %v1831
  %v1946 = vadd.f32 %v1112, %v1836
  %v1947 = vadd.f32 %v1113, %v1841
  %v1948 = vadd.f32 %v1114, %v1846
  %v1949 = vadd.f32 %v1115, %v1851
  %v1950 = vadd.f32 %v1116, %v1856
  %v1951 = vadd.f32 %v1117, %v1861
  %v1952 = vadd.f32 %v1118, %v1866
  %v1953 = vadd.f32 %v1119, %v1871
  %v1954 = vadd.f32 %v1120, %v1876
  %v1955 = vadd.f32 %v1121, %v1881
  %v1956 = vadd.f32 %v1122, %v1886
  %v1957 = vadd.f32 %v1123, %v1891
  %vm1958 = vcmask 31744
  %1959 = vst.msk [vmem:[%s2] sm:$0xff] %vm1958, %v1894
  %1960 = vst.msk [vmem:[%s2 + $0x8] sm:$0xff] %vm1958, %v1895
  %1961 = vst.msk [vmem:[%s2 + $0x10] sm:$0xff] %vm1958, %v1896
  %1962 = vst.msk [vmem:[%s2 + $0x18] sm:$0xff] %vm1958, %v1897
  %1963 = vst.msk [vmem:[%s2 + $0x20] sm:$0xff] %vm1958, %v1898
  %1964 = vst.msk [vmem:[%s2 + $0x28] sm:$0xff] %vm1958, %v1899
  %1965 = vst.msk [vmem:[%s2 + $0x30] sm:$0xff] %vm1958, %v1900
  %1966 = vst.msk [vmem:[%s2 + $0x38] sm:$0xff] %vm1958, %v1901
  %1967 = vst.msk [vmem:[%s2 + $0x40] sm:$0xff] %vm1958, %v1902
  %1968 = vst.msk [vmem:[%s2 + $0x48] sm:$0xff] %vm1958, %v1903
  %1969 = vst.msk [vmem:[%s2 + $0x50] sm:$0xff] %vm1958, %v1904
  %1970 = vst.msk [vmem:[%s2 + $0x58] sm:$0xff] %vm1958, %v1905
  %1971 = vst.msk [vmem:[%s2 + $0x60] sm:$0xff] %vm1958, %v1906
  %1972 = vst.msk [vmem:[%s2 + $0x68] sm:$0xff] %vm1958, %v1907
  %1973 = vst.msk [vmem:[%s2 + $0x70] sm:$0xff] %vm1958, %v1908
  %1974 = vst.msk [vmem:[%s2 + $0x78] sm:$0xff] %vm1958, %v1909
  %1975 = vst.msk [vmem:[%s2 + $0x80] sm:$0xff] %vm1958, %v1910
  %1976 = vst.msk [vmem:[%s2 + $0x88] sm:$0xff] %vm1958, %v1911
  %1977 = vst.msk [vmem:[%s2 + $0x90] sm:$0xff] %vm1958, %v1912
  %1978 = vst.msk [vmem:[%s2 + $0x98] sm:$0xff] %vm1958, %v1913
  %1979 = vst.msk [vmem:[%s2 + $0xa0] sm:$0xff] %vm1958, %v1914
  %1980 = vst.msk [vmem:[%s2 + $0xa8] sm:$0xff] %vm1958, %v1915
  %1981 = vst.msk [vmem:[%s2 + $0xb0] sm:$0xff] %vm1958, %v1916
  %1982 = vst.msk [vmem:[%s2 + $0xb8] sm:$0xff] %vm1958, %v1917
  %1983 = vst.msk [vmem:[%s2 + $0xc0] sm:$0xff] %vm1958, %v1918
  %1984 = vst.msk [vmem:[%s2 + $0xc8] sm:$0xff] %vm1958, %v1919
  %1985 = vst.msk [vmem:[%s2 + $0xd0] sm:$0xff] %vm1958, %v1920
  %1986 = vst.msk [vmem:[%s2 + $0xd8] sm:$0xff] %vm1958, %v1921
  %1987 = vst.msk [vmem:[%s2 + $0xe0] sm:$0xff] %vm1958, %v1922
  %1988 = vst.msk [vmem:[%s2 + $0xe8] sm:$0xff] %vm1958, %v1923
  %1989 = vst.msk [vmem:[%s2 + $0xf0] sm:$0xff] %vm1958, %v1924
  %1990 = vst.msk [vmem:[%s2 + $0xf8] sm:$0xff] %vm1958, %v1925
  %1991 = vst.msk [vmem:[%s2 + $0x100] sm:$0xff] %vm1958, %v1926
  %1992 = vst.msk [vmem:[%s2 + $0x108] sm:$0xff] %vm1958, %v1927
  %1993 = vst.msk [vmem:[%s2 + $0x110] sm:$0xff] %vm1958, %v1928
  %1994 = vst.msk [vmem:[%s2 + $0x118] sm:$0xff] %vm1958, %v1929
  %1995 = vst.msk [vmem:[%s2 + $0x120] sm:$0xff] %vm1958, %v1930
  %1996 = vst.msk [vmem:[%s2 + $0x128] sm:$0xff] %vm1958, %v1931
  %1997 = vst.msk [vmem:[%s2 + $0x130] sm:$0xff] %vm1958, %v1932
  %1998 = vst.msk [vmem:[%s2 + $0x138] sm:$0xff] %vm1958, %v1933
  %1999 = vst.msk [vmem:[%s2 + $0x140] sm:$0xff] %vm1958, %v1934
  %2000 = vst.msk [vmem:[%s2 + $0x148] sm:$0xff] %vm1958, %v1935
  %2001 = vst.msk [vmem:[%s2 + $0x150] sm:$0xff] %vm1958, %v1936
  %2002 = vst.msk [vmem:[%s2 + $0x158] sm:$0xff] %vm1958, %v1937
  %2003 = vst.msk [vmem:[%s2 + $0x160] sm:$0xff] %vm1958, %v1938
  %2004 = vst.msk [vmem:[%s2 + $0x168] sm:$0xff] %vm1958, %v1939
  %2005 = vst.msk [vmem:[%s2 + $0x170] sm:$0xff] %vm1958, %v1940
  %2006 = vst.msk [vmem:[%s2 + $0x178] sm:$0xff] %vm1958, %v1941
  %2007 = vst.msk [vmem:[%s2 + $0x180] sm:$0xff] %vm1958, %v1942
  %2008 = vst.msk [vmem:[%s2 + $0x188] sm:$0xff] %vm1958, %v1943
  %2009 = vst.msk [vmem:[%s2 + $0x190] sm:$0xff] %vm1958, %v1944
  %2010 = vst.msk [vmem:[%s2 + $0x198] sm:$0xff] %vm1958, %v1945
  %2011 = vst.msk [vmem:[%s2 + $0x1a0] sm:$0xff] %vm1958, %v1946
  %2012 = vst.msk [vmem:[%s2 + $0x1a8] sm:$0xff] %vm1958, %v1947
  %2013 = vst.msk [vmem:[%s2 + $0x1b0] sm:$0xff] %vm1958, %v1948
  %2014 = vst.msk [vmem:[%s2 + $0x1b8] sm:$0xff] %vm1958, %v1949
  %2015 = vst.msk [vmem:[%s2 + $0x1c0] sm:$0xff] %vm1958, %v1950
  %2016 = vst.msk [vmem:[%s2 + $0x1c8] sm:$0xff] %vm1958, %v1951
  %2017 = vst.msk [vmem:[%s2 + $0x1d0] sm:$0xff] %vm1958, %v1952
  %2018 = vst.msk [vmem:[%s2 + $0x1d8] sm:$0xff] %vm1958, %v1953
  %2019 = vst.msk [vmem:[%s2 + $0x1e0] sm:$0xff] %vm1958, %v1954
  %2020 = vst.msk [vmem:[%s2 + $0x1e8] sm:$0xff] %vm1958, %v1955
  %2021 = vst.msk [vmem:[%s2 + $0x1f0] sm:$0xff] %vm1958, %v1956
  %2022 = vst.msk [vmem:[%s2 + $0x1f8] sm:$0xff] %vm1958, %v1957
  // Predicated region
  $region14: #{segment_mean_padded.1} parent=0 // pred_check
    %p2023 = pneg %p11
  $region15: #{segment_mean_padded.1} parent=0 // pred_check_branch
    %2025 = sbr.rel (%p2023) target = $region17
  $region16: #{segment_mean_padded.1} parent=0 // pred_region
    %v2026 = vld [vmem:[%s2] sm:$0xff]
    %v2027 = vld [vmem:[%s2 + $0x8] sm:$0xff]
    %v2028 = vld [vmem:[%s2 + $0x10] sm:$0xff]
    %v2029 = vld [vmem:[%s2 + $0x18] sm:$0xff]
    %v2030 = vld [vmem:[%s2 + $0x20] sm:$0xff]
    %v2031 = vld [vmem:[%s2 + $0x28] sm:$0xff]
    %v2032 = vld [vmem:[%s2 + $0x30] sm:$0xff]
    %v2033 = vld [vmem:[%s2 + $0x38] sm:$0xff]
    %v2034 = vld [vmem:[%s2 + $0x40] sm:$0xff]
    %v2035 = vld [vmem:[%s2 + $0x48] sm:$0xff]
    %v2036 = vld [vmem:[%s2 + $0x50] sm:$0xff]
    %v2037 = vld [vmem:[%s2 + $0x58] sm:$0xff]
    %v2038 = vld [vmem:[%s2 + $0x60] sm:$0xff]
    %v2039 = vld [vmem:[%s2 + $0x68] sm:$0xff]
    %v2040 = vld [vmem:[%s2 + $0x70] sm:$0xff]
    %v2041 = vld [vmem:[%s2 + $0x78] sm:$0xff]
    %v2042 = vld [vmem:[%s2 + $0x80] sm:$0xff]
    %v2043 = vld [vmem:[%s2 + $0x88] sm:$0xff]
    %v2044 = vld [vmem:[%s2 + $0x90] sm:$0xff]
    %v2045 = vld [vmem:[%s2 + $0x98] sm:$0xff]
    %v2046 = vld [vmem:[%s2 + $0xa0] sm:$0xff]
    %v2047 = vld [vmem:[%s2 + $0xa8] sm:$0xff]
    %v2048 = vld [vmem:[%s2 + $0xb0] sm:$0xff]
    %v2049 = vld [vmem:[%s2 + $0xb8] sm:$0xff]
    %v2050 = vld [vmem:[%s2 + $0xc0] sm:$0xff]
    %v2051 = vld [vmem:[%s2 + $0xc8] sm:$0xff]
    %v2052 = vld [vmem:[%s2 + $0xd0] sm:$0xff]
    %v2053 = vld [vmem:[%s2 + $0xd8] sm:$0xff]
    %v2054 = vld [vmem:[%s2 + $0xe0] sm:$0xff]
    %v2055 = vld [vmem:[%s2 + $0xe8] sm:$0xff]
    %v2056 = vld [vmem:[%s2 + $0xf0] sm:$0xff]
    %v2057 = vld [vmem:[%s2 + $0xf8] sm:$0xff]
    %v2058 = vld [vmem:[%s2 + $0x100] sm:$0xff]
    %v2059 = vld [vmem:[%s2 + $0x108] sm:$0xff]
    %v2060 = vld [vmem:[%s2 + $0x110] sm:$0xff]
    %v2061 = vld [vmem:[%s2 + $0x118] sm:$0xff]
    %v2062 = vld [vmem:[%s2 + $0x120] sm:$0xff]
    %v2063 = vld [vmem:[%s2 + $0x128] sm:$0xff]
    %v2064 = vld [vmem:[%s2 + $0x130] sm:$0xff]
    %v2065 = vld [vmem:[%s2 + $0x138] sm:$0xff]
    %v2066 = vld [vmem:[%s2 + $0x140] sm:$0xff]
    %v2067 = vld [vmem:[%s2 + $0x148] sm:$0xff]
    %v2068 = vld [vmem:[%s2 + $0x150] sm:$0xff]
    %v2069 = vld [vmem:[%s2 + $0x158] sm:$0xff]
    %v2070 = vld [vmem:[%s2 + $0x160] sm:$0xff]
    %v2071 = vld [vmem:[%s2 + $0x168] sm:$0xff]
    %v2072 = vld [vmem:[%s2 + $0x170] sm:$0xff]
    %v2073 = vld [vmem:[%s2 + $0x178] sm:$0xff]
    %v2074 = vld [vmem:[%s2 + $0x180] sm:$0xff]
    %v2075 = vld [vmem:[%s2 + $0x188] sm:$0xff]
    %v2076 = vld [vmem:[%s2 + $0x190] sm:$0xff]
    %v2077 = vld [vmem:[%s2 + $0x198] sm:$0xff]
    %v2078 = vld [vmem:[%s2 + $0x1a0] sm:$0xff]
    %v2079 = vld [vmem:[%s2 + $0x1a8] sm:$0xff]
    %v2080 = vld [vmem:[%s2 + $0x1b0] sm:$0xff]
    %v2081 = vld [vmem:[%s2 + $0x1b8] sm:$0xff]
    %v2082 = vld [vmem:[%s2 + $0x1c0] sm:$0xff]
    %v2083 = vld [vmem:[%s2 + $0x1c8] sm:$0xff]
    %v2084 = vld [vmem:[%s2 + $0x1d0] sm:$0xff]
    %v2085 = vld [vmem:[%s2 + $0x1d8] sm:$0xff]
    %v2086 = vld [vmem:[%s2 + $0x1e0] sm:$0xff]
    %v2087 = vld [vmem:[%s2 + $0x1e8] sm:$0xff]
    %v2088 = vld [vmem:[%s2 + $0x1f0] sm:$0xff]
    %v2089 = vld [vmem:[%s2 + $0x1f8] sm:$0xff]
    %v2090 = vmax.f32 %v2026, 1.0
    %v2091 = vmax.f32 %v2027, 1.0
    %v2092 = vmax.f32 %v2028, 1.0
    %v2093 = vmax.f32 %v2029, 1.0
    %v2094 = vmax.f32 %v2030, 1.0
    %v2095 = vmax.f32 %v2031, 1.0
    %v2096 = vmax.f32 %v2032, 1.0
    %v2097 = vmax.f32 %v2033, 1.0
    %v2098 = vmax.f32 %v2034, 1.0
    %v2099 = vmax.f32 %v2035, 1.0
    %v2100 = vmax.f32 %v2036, 1.0
    %v2101 = vmax.f32 %v2037, 1.0
    %v2102 = vmax.f32 %v2038, 1.0
    %v2103 = vmax.f32 %v2039, 1.0
    %v2104 = vmax.f32 %v2040, 1.0
    %v2105 = vmax.f32 %v2041, 1.0
    %v2106 = vmax.f32 %v2042, 1.0
    %v2107 = vmax.f32 %v2043, 1.0
    %v2108 = vmax.f32 %v2044, 1.0
    %v2109 = vmax.f32 %v2045, 1.0
    %v2110 = vmax.f32 %v2046, 1.0
    %v2111 = vmax.f32 %v2047, 1.0
    %v2112 = vmax.f32 %v2048, 1.0
    %v2113 = vmax.f32 %v2049, 1.0
    %v2114 = vmax.f32 %v2050, 1.0
    %v2115 = vmax.f32 %v2051, 1.0
    %v2116 = vmax.f32 %v2052, 1.0
    %v2117 = vmax.f32 %v2053, 1.0
    %v2118 = vmax.f32 %v2054, 1.0
    %v2119 = vmax.f32 %v2055, 1.0
    %v2120 = vmax.f32 %v2056, 1.0
    %v2121 = vmax.f32 %v2057, 1.0
    %v2122 = vmax.f32 %v2058, 1.0
    %v2123 = vmax.f32 %v2059, 1.0
    %v2124 = vmax.f32 %v2060, 1.0
    %v2125 = vmax.f32 %v2061, 1.0
    %v2126 = vmax.f32 %v2062, 1.0
    %v2127 = vmax.f32 %v2063, 1.0
    %v2128 = vmax.f32 %v2064, 1.0
    %v2129 = vmax.f32 %v2065, 1.0
    %v2130 = vmax.f32 %v2066, 1.0
    %v2131 = vmax.f32 %v2067, 1.0
    %v2132 = vmax.f32 %v2068, 1.0
    %v2133 = vmax.f32 %v2069, 1.0
    %v2134 = vmax.f32 %v2070, 1.0
    %v2135 = vmax.f32 %v2071, 1.0
    %v2136 = vmax.f32 %v2072, 1.0
    %v2137 = vmax.f32 %v2073, 1.0
    %v2138 = vmax.f32 %v2074, 1.0
    %v2139 = vmax.f32 %v2075, 1.0
    %v2140 = vmax.f32 %v2076, 1.0
    %v2141 = vmax.f32 %v2077, 1.0
    %v2142 = vmax.f32 %v2078, 1.0
    %v2143 = vmax.f32 %v2079, 1.0
    %v2144 = vmax.f32 %v2080, 1.0
    %v2145 = vmax.f32 %v2081, 1.0
    %v2146 = vmax.f32 %v2082, 1.0
    %v2147 = vmax.f32 %v2083, 1.0
    %v2148 = vmax.f32 %v2084, 1.0
    %v2149 = vmax.f32 %v2085, 1.0
    %v2150 = vmax.f32 %v2086, 1.0
    %v2151 = vmax.f32 %v2087, 1.0
    %v2152 = vmax.f32 %v2088, 1.0
    %v2153 = vmax.f32 %v2089, 1.0
    %2155 = vset.pattern.permute.xlu0 3
    %2156 = vperm.xlu0 %2155, %v2090
    %v2157 = vpop.permute.xlu0 %2156
    %2160 = vset.pattern.permute.xlu0 3
    %2161 = vperm.xlu0 %2160, %v2091
    %v2162 = vpop.permute.xlu0 %2161
    %2165 = vset.pattern.permute.xlu0 3
    %2166 = vperm.xlu0 %2165, %v2092
    %v2167 = vpop.permute.xlu0 %2166
    %2170 = vset.pattern.permute.xlu0 3
    %2171 = vperm.xlu0 %2170, %v2093
    %v2172 = vpop.permute.xlu0 %2171
    %2175 = vset.pattern.permute.xlu0 3
    %2176 = vperm.xlu0 %2175, %v2094
    %v2177 = vpop.permute.xlu0 %2176
    %2180 = vset.pattern.permute.xlu0 3
    %2181 = vperm.xlu0 %2180, %v2095
    %v2182 = vpop.permute.xlu0 %2181
    %2185 = vset.pattern.permute.xlu0 3
    %2186 = vperm.xlu0 %2185, %v2096
    %v2187 = vpop.permute.xlu0 %2186
    %2190 = vset.pattern.permute.xlu0 3
    %2191 = vperm.xlu0 %2190, %v2097
    %v2192 = vpop.permute.xlu0 %2191
    %2195 = vset.pattern.permute.xlu0 3
    %2196 = vperm.xlu0 %2195, %v2098
    %v2197 = vpop.permute.xlu0 %2196
    %2200 = vset.pattern.permute.xlu0 3
    %2201 = vperm.xlu0 %2200, %v2099
    %v2202 = vpop.permute.xlu0 %2201
    %2205 = vset.pattern.permute.xlu0 3
    %2206 = vperm.xlu0 %2205, %v2100
    %v2207 = vpop.permute.xlu0 %2206
    %2210 = vset.pattern.permute.xlu0 3
    %2211 = vperm.xlu0 %2210, %v2101
    %v2212 = vpop.permute.xlu0 %2211
    %2215 = vset.pattern.permute.xlu0 3
    %2216 = vperm.xlu0 %2215, %v2102
    %v2217 = vpop.permute.xlu0 %2216
    %2220 = vset.pattern.permute.xlu0 3
    %2221 = vperm.xlu0 %2220, %v2103
    %v2222 = vpop.permute.xlu0 %2221
    %2225 = vset.pattern.permute.xlu0 3
    %2226 = vperm.xlu0 %2225, %v2104
    %v2227 = vpop.permute.xlu0 %2226
    %2230 = vset.pattern.permute.xlu0 3
    %2231 = vperm.xlu0 %2230, %v2105
    %v2232 = vpop.permute.xlu0 %2231
    %2235 = vset.pattern.permute.xlu0 3
    %2236 = vperm.xlu0 %2235, %v2106
    %v2237 = vpop.permute.xlu0 %2236
    %2240 = vset.pattern.permute.xlu0 3
    %2241 = vperm.xlu0 %2240, %v2107
    %v2242 = vpop.permute.xlu0 %2241
    %2245 = vset.pattern.permute.xlu0 3
    %2246 = vperm.xlu0 %2245, %v2108
    %v2247 = vpop.permute.xlu0 %2246
    %2250 = vset.pattern.permute.xlu0 3
    %2251 = vperm.xlu0 %2250, %v2109
    %v2252 = vpop.permute.xlu0 %2251
    %2255 = vset.pattern.permute.xlu0 3
    %2256 = vperm.xlu0 %2255, %v2110
    %v2257 = vpop.permute.xlu0 %2256
    %2260 = vset.pattern.permute.xlu0 3
    %2261 = vperm.xlu0 %2260, %v2111
    %v2262 = vpop.permute.xlu0 %2261
    %2265 = vset.pattern.permute.xlu0 3
    %2266 = vperm.xlu0 %2265, %v2112
    %v2267 = vpop.permute.xlu0 %2266
    %2270 = vset.pattern.permute.xlu0 3
    %2271 = vperm.xlu0 %2270, %v2113
    %v2272 = vpop.permute.xlu0 %2271
    %2275 = vset.pattern.permute.xlu0 3
    %2276 = vperm.xlu0 %2275, %v2114
    %v2277 = vpop.permute.xlu0 %2276
    %2280 = vset.pattern.permute.xlu0 3
    %2281 = vperm.xlu0 %2280, %v2115
    %v2282 = vpop.permute.xlu0 %2281
    %2285 = vset.pattern.permute.xlu0 3
    %2286 = vperm.xlu0 %2285, %v2116
    %v2287 = vpop.permute.xlu0 %2286
    %2290 = vset.pattern.permute.xlu0 3
    %2291 = vperm.xlu0 %2290, %v2117
    %v2292 = vpop.permute.xlu0 %2291
    %2295 = vset.pattern.permute.xlu0 3
    %2296 = vperm.xlu0 %2295, %v2118
    %v2297 = vpop.permute.xlu0 %2296
    %2300 = vset.pattern.permute.xlu0 3
    %2301 = vperm.xlu0 %2300, %v2119
    %v2302 = vpop.permute.xlu0 %2301
    %2305 = vset.pattern.permute.xlu0 3
    %2306 = vperm.xlu0 %2305, %v2120
    %v2307 = vpop.permute.xlu0 %2306
    %2310 = vset.pattern.permute.xlu0 3
    %2311 = vperm.xlu0 %2310, %v2121
    %v2312 = vpop.permute.xlu0 %2311
    %2315 = vset.pattern.permute.xlu0 3
    %2316 = vperm.xlu0 %2315, %v2122
    %v2317 = vpop.permute.xlu0 %2316
    %2320 = vset.pattern.permute.xlu0 3
    %2321 = vperm.xlu0 %2320, %v2123
    %v2322 = vpop.permute.xlu0 %2321
    %2325 = vset.pattern.permute.xlu0 3
    %2326 = vperm.xlu0 %2325, %v2124
    %v2327 = vpop.permute.xlu0 %2326
    %2330 = vset.pattern.permute.xlu0 3
    %2331 = vperm.xlu0 %2330, %v2125
    %v2332 = vpop.permute.xlu0 %2331
    %2335 = vset.pattern.permute.xlu0 3
    %2336 = vperm.xlu0 %2335, %v2126
    %v2337 = vpop.permute.xlu0 %2336
    %2340 = vset.pattern.permute.xlu0 3
    %2341 = vperm.xlu0 %2340, %v2127
    %v2342 = vpop.permute.xlu0 %2341
    %2345 = vset.pattern.permute.xlu0 3
    %2346 = vperm.xlu0 %2345, %v2128
    %v2347 = vpop.permute.xlu0 %2346
    %2350 = vset.pattern.permute.xlu0 3
    %2351 = vperm.xlu0 %2350, %v2129
    %v2352 = vpop.permute.xlu0 %2351
    %2355 = vset.pattern.permute.xlu0 3
    %2356 = vperm.xlu0 %2355, %v2130
    %v2357 = vpop.permute.xlu0 %2356
    %2360 = vset.pattern.permute.xlu0 3
    %2361 = vperm.xlu0 %2360, %v2131
    %v2362 = vpop.permute.xlu0 %2361
    %2365 = vset.pattern.permute.xlu0 3
    %2366 = vperm.xlu0 %2365, %v2132
    %v2367 = vpop.permute.xlu0 %2366
    %2370 = vset.pattern.permute.xlu0 3
    %2371 = vperm.xlu0 %2370, %v2133
    %v2372 = vpop.permute.xlu0 %2371
    %2375 = vset.pattern.permute.xlu0 3
    %2376 = vperm.xlu0 %2375, %v2134
    %v2377 = vpop.permute.xlu0 %2376
    %2380 = vset.pattern.permute.xlu0 3
    %2381 = vperm.xlu0 %2380, %v2135
    %v2382 = vpop.permute.xlu0 %2381
    %2385 = vset.pattern.permute.xlu0 3
    %2386 = vperm.xlu0 %2385, %v2136
    %v2387 = vpop.permute.xlu0 %2386
    %2390 = vset.pattern.permute.xlu0 3
    %2391 = vperm.xlu0 %2390, %v2137
    %v2392 = vpop.permute.xlu0 %2391
    %2395 = vset.pattern.permute.xlu0 3
    %2396 = vperm.xlu0 %2395, %v2138
    %v2397 = vpop.permute.xlu0 %2396
    %2400 = vset.pattern.permute.xlu0 3
    %2401 = vperm.xlu0 %2400, %v2139
    %v2402 = vpop.permute.xlu0 %2401
    %2405 = vset.pattern.permute.xlu0 3
    %2406 = vperm.xlu0 %2405, %v2140
    %v2407 = vpop.permute.xlu0 %2406
    %2410 = vset.pattern.permute.xlu0 3
    %2411 = vperm.xlu0 %2410, %v2141
    %v2412 = vpop.permute.xlu0 %2411
    %2415 = vset.pattern.permute.xlu0 3
    %2416 = vperm.xlu0 %2415, %v2142
    %v2417 = vpop.permute.xlu0 %2416
    %2420 = vset.pattern.permute.xlu0 3
    %2421 = vperm.xlu0 %2420, %v2143
    %v2422 = vpop.permute.xlu0 %2421
    %2425 = vset.pattern.permute.xlu0 3
    %2426 = vperm.xlu0 %2425, %v2144
    %v2427 = vpop.permute.xlu0 %2426
    %2430 = vset.pattern.permute.xlu0 3
    %2431 = vperm.xlu0 %2430, %v2145
    %v2432 = vpop.permute.xlu0 %2431
    %2435 = vset.pattern.permute.xlu0 3
    %2436 = vperm.xlu0 %2435, %v2146
    %v2437 = vpop.permute.xlu0 %2436
    %2440 = vset.pattern.permute.xlu0 3
    %2441 = vperm.xlu0 %2440, %v2147
    %v2442 = vpop.permute.xlu0 %2441
    %2445 = vset.pattern.permute.xlu0 3
    %2446 = vperm.xlu0 %2445, %v2148
    %v2447 = vpop.permute.xlu0 %2446
    %2450 = vset.pattern.permute.xlu0 3
    %2451 = vperm.xlu0 %2450, %v2149
    %v2452 = vpop.permute.xlu0 %2451
    %2455 = vset.pattern.permute.xlu0 3
    %2456 = vperm.xlu0 %2455, %v2150
    %v2457 = vpop.permute.xlu0 %2456
    %2460 = vset.pattern.permute.xlu0 3
    %2461 = vperm.xlu0 %2460, %v2151
    %v2462 = vpop.permute.xlu0 %2461
    %2465 = vset.pattern.permute.xlu0 3
    %2466 = vperm.xlu0 %2465, %v2152
    %v2467 = vpop.permute.xlu0 %2466
    %2470 = vset.pattern.permute.xlu0 3
    %2471 = vperm.xlu0 %2470, %v2153
    %v2472 = vpop.permute.xlu0 %2471
    %v2474 = vadd.f32 %v2026, 0.0
    %v2475 = vadd.f32 %v2027, 0.0
    %v2476 = vadd.f32 %v2028, 0.0
    %v2477 = vadd.f32 %v2029, 0.0
    %v2478 = vadd.f32 %v2030, 0.0
    %v2479 = vadd.f32 %v2031, 0.0
    %v2480 = vadd.f32 %v2032, 0.0
    %v2481 = vadd.f32 %v2033, 0.0
    %v2482 = vadd.f32 %v2034, 0.0
    %v2483 = vadd.f32 %v2035, 0.0
    %v2484 = vadd.f32 %v2036, 0.0
    %v2485 = vadd.f32 %v2037, 0.0
    %v2486 = vadd.f32 %v2038, 0.0
    %v2487 = vadd.f32 %v2039, 0.0
    %v2488 = vadd.f32 %v2040, 0.0
    %v2489 = vadd.f32 %v2041, 0.0
    %v2490 = vadd.f32 %v2042, 0.0
    %v2491 = vadd.f32 %v2043, 0.0
    %v2492 = vadd.f32 %v2044, 0.0
    %v2493 = vadd.f32 %v2045, 0.0
    %v2494 = vadd.f32 %v2046, 0.0
    %v2495 = vadd.f32 %v2047, 0.0
    %v2496 = vadd.f32 %v2048, 0.0
    %v2497 = vadd.f32 %v2049, 0.0
    %v2498 = vadd.f32 %v2050, 0.0
    %v2499 = vadd.f32 %v2051, 0.0
    %v2500 = vadd.f32 %v2052, 0.0
    %v2501 = vadd.f32 %v2053, 0.0
    %v2502 = vadd.f32 %v2054, 0.0
    %v2503 = vadd.f32 %v2055, 0.0
    %v2504 = vadd.f32 %v2056, 0.0
    %v2505 = vadd.f32 %v2057, 0.0
    %v2506 = vadd.f32 %v2058, 0.0
    %v2507 = vadd.f32 %v2059, 0.0
    %v2508 = vadd.f32 %v2060, 0.0
    %v2509 = vadd.f32 %v2061, 0.0
    %v2510 = vadd.f32 %v2062, 0.0
    %v2511 = vadd.f32 %v2063, 0.0
    %v2512 = vadd.f32 %v2064, 0.0
    %v2513 = vadd.f32 %v2065, 0.0
    %v2514 = vadd.f32 %v2066, 0.0
    %v2515 = vadd.f32 %v2067, 0.0
    %v2516 = vadd.f32 %v2068, 0.0
    %v2517 = vadd.f32 %v2069, 0.0
    %v2518 = vadd.f32 %v2070, 0.0
    %v2519 = vadd.f32 %v2071, 0.0
    %v2520 = vadd.f32 %v2072, 0.0
    %v2521 = vadd.f32 %v2073, 0.0
    %v2522 = vadd.f32 %v2074, 0.0
    %v2523 = vadd.f32 %v2075, 0.0
    %v2524 = vadd.f32 %v2076, 0.0
    %v2525 = vadd.f32 %v2077, 0.0
    %v2526 = vadd.f32 %v2078, 0.0
    %v2527 = vadd.f32 %v2079, 0.0
    %v2528 = vadd.f32 %v2080, 0.0
    %v2529 = vadd.f32 %v2081, 0.0
    %v2530 = vadd.f32 %v2082, 0.0
    %v2531 = vadd.f32 %v2083, 0.0
    %v2532 = vadd.f32 %v2084, 0.0
    %v2533 = vadd.f32 %v2085, 0.0
    %v2534 = vadd.f32 %v2086, 0.0
    %v2535 = vadd.f32 %v2087, 0.0
    %v2536 = vadd.f32 %v2088, 0.0
    %v2537 = vadd.f32 %v2089, 0.0
    %v2538 = vrcp.pop %v2157
    %v2539 = vmul.f32 %v2474, %v2538
    %v2540 = vrcp.pop %v2162
    %v2541 = vmul.f32 %v2475, %v2540
    %v2542 = vrcp.pop %v2167
    %v2543 = vmul.f32 %v2476, %v2542
    %v2544 = vrcp.pop %v2172
    %v2545 = vmul.f32 %v2477, %v2544
    %v2546 = vrcp.pop %v2177
    %v2547 = vmul.f32 %v2478, %v2546
    %v2548 = vrcp.pop %v2182
    %v2549 = vmul.f32 %v2479, %v2548
    %v2550 = vrcp.pop %v2187
    %v2551 = vmul.f32 %v2480, %v2550
    %v2552 = vrcp.pop %v2192
    %v2553 = vmul.f32 %v2481, %v2552
    %v2554 = vrcp.pop %v2197
    %v2555 = vmul.f32 %v2482, %v2554
    %v2556 = vrcp.pop %v2202
    %v2557 = vmul.f32 %v2483, %v2556
    %v2558 = vrcp.pop %v2207
    %v2559 = vmul.f32 %v2484, %v2558
    %v2560 = vrcp.pop %v2212
    %v2561 = vmul.f32 %v2485, %v2560
    %v2562 = vrcp.pop %v2217
    %v2563 = vmul.f32 %v2486, %v2562
    %v2564 = vrcp.pop %v2222
    %v2565 = vmul.f32 %v2487, %v2564
    %v2566 = vrcp.pop %v2227
    %v2567 = vmul.f32 %v2488, %v2566
    %v2568 = vrcp.pop %v2232
    %v2569 = vmul.f32 %v2489, %v2568
    %v2570 = vrcp.pop %v2237
    %v2571 = vmul.f32 %v2490, %v2570
    %v2572 = vrcp.pop %v2242
    %v2573 = vmul.f32 %v2491, %v2572
    %v2574 = vrcp.pop %v2247
    %v2575 = vmul.f32 %v2492, %v2574
    %v2576 = vrcp.pop %v2252
    %v2577 = vmul.f32 %v2493, %v2576
    %v2578 = vrcp.pop %v2257
    %v2579 = vmul.f32 %v2494, %v2578
    %v2580 = vrcp.pop %v2262
    %v2581 = vmul.f32 %v2495, %v2580
    %v2582 = vrcp.pop %v2267
    %v2583 = vmul.f32 %v2496, %v2582
    %v2584 = vrcp.pop %v2272
    %v2585 = vmul.f32 %v2497, %v2584
    %v2586 = vrcp.pop %v2277
    %v2587 = vmul.f32 %v2498, %v2586
    %v2588 = vrcp.pop %v2282
    %v2589 = vmul.f32 %v2499, %v2588
    %v2590 = vrcp.pop %v2287
    %v2591 = vmul.f32 %v2500, %v2590
    %v2592 = vrcp.pop %v2292
    %v2593 = vmul.f32 %v2501, %v2592
    %v2594 = vrcp.pop %v2297
    %v2595 = vmul.f32 %v2502, %v2594
    %v2596 = vrcp.pop %v2302
    %v2597 = vmul.f32 %v2503, %v2596
    %v2598 = vrcp.pop %v2307
    %v2599 = vmul.f32 %v2504, %v2598
    %v2600 = vrcp.pop %v2312
    %v2601 = vmul.f32 %v2505, %v2600
    %v2602 = vrcp.pop %v2317
    %v2603 = vmul.f32 %v2506, %v2602
    %v2604 = vrcp.pop %v2322
    %v2605 = vmul.f32 %v2507, %v2604
    %v2606 = vrcp.pop %v2327
    %v2607 = vmul.f32 %v2508, %v2606
    %v2608 = vrcp.pop %v2332
    %v2609 = vmul.f32 %v2509, %v2608
    %v2610 = vrcp.pop %v2337
    %v2611 = vmul.f32 %v2510, %v2610
    %v2612 = vrcp.pop %v2342
    %v2613 = vmul.f32 %v2511, %v2612
    %v2614 = vrcp.pop %v2347
    %v2615 = vmul.f32 %v2512, %v2614
    %v2616 = vrcp.pop %v2352
    %v2617 = vmul.f32 %v2513, %v2616
    %v2618 = vrcp.pop %v2357
    %v2619 = vmul.f32 %v2514, %v2618
    %v2620 = vrcp.pop %v2362
    %v2621 = vmul.f32 %v2515, %v2620
    %v2622 = vrcp.pop %v2367
    %v2623 = vmul.f32 %v2516, %v2622
    %v2624 = vrcp.pop %v2372
    %v2625 = vmul.f32 %v2517, %v2624
    %v2626 = vrcp.pop %v2377
    %v2627 = vmul.f32 %v2518, %v2626
    %v2628 = vrcp.pop %v2382
    %v2629 = vmul.f32 %v2519, %v2628
    %v2630 = vrcp.pop %v2387
    %v2631 = vmul.f32 %v2520, %v2630
    %v2632 = vrcp.pop %v2392
    %v2633 = vmul.f32 %v2521, %v2632
    %v2634 = vrcp.pop %v2397
    %v2635 = vmul.f32 %v2522, %v2634
    %v2636 = vrcp.pop %v2402
    %v2637 = vmul.f32 %v2523, %v2636
    %v2638 = vrcp.pop %v2407
    %v2639 = vmul.f32 %v2524, %v2638
    %v2640 = vrcp.pop %v2412
    %v2641 = vmul.f32 %v2525, %v2640
    %v2642 = vrcp.pop %v2417
    %v2643 = vmul.f32 %v2526, %v2642
    %v2644 = vrcp.pop %v2422
    %v2645 = vmul.f32 %v2527, %v2644
    %v2646 = vrcp.pop %v2427
    %v2647 = vmul.f32 %v2528, %v2646
    %v2648 = vrcp.pop %v2432
    %v2649 = vmul.f32 %v2529, %v2648
    %v2650 = vrcp.pop %v2437
    %v2651 = vmul.f32 %v2530, %v2650
    %v2652 = vrcp.pop %v2442
    %v2653 = vmul.f32 %v2531, %v2652
    %v2654 = vrcp.pop %v2447
    %v2655 = vmul.f32 %v2532, %v2654
    %v2656 = vrcp.pop %v2452
    %v2657 = vmul.f32 %v2533, %v2656
    %v2658 = vrcp.pop %v2457
    %v2659 = vmul.f32 %v2534, %v2658
    %v2660 = vrcp.pop %v2462
    %v2661 = vmul.f32 %v2535, %v2660
    %v2662 = vrcp.pop %v2467
    %v2663 = vmul.f32 %v2536, %v2662
    %v2664 = vrcp.pop %v2472
    %v2665 = vmul.f32 %v2537, %v2664
    %2666 = vst.msk [vmem:[%s2] sm:$0xff] %vm1958, %v2539
    %2667 = vst.msk [vmem:[%s2 + $0x8] sm:$0xff] %vm1958, %v2541
    %2668 = vst.msk [vmem:[%s2 + $0x10] sm:$0xff] %vm1958, %v2543
    %2669 = vst.msk [vmem:[%s2 + $0x18] sm:$0xff] %vm1958, %v2545
    %2670 = vst.msk [vmem:[%s2 + $0x20] sm:$0xff] %vm1958, %v2547
    %2671 = vst.msk [vmem:[%s2 + $0x28] sm:$0xff] %vm1958, %v2549
    %2672 = vst.msk [vmem:[%s2 + $0x30] sm:$0xff] %vm1958, %v2551
    %2673 = vst.msk [vmem:[%s2 + $0x38] sm:$0xff] %vm1958, %v2553
    %2674 = vst.msk [vmem:[%s2 + $0x40] sm:$0xff] %vm1958, %v2555
    %2675 = vst.msk [vmem:[%s2 + $0x48] sm:$0xff] %vm1958, %v2557
    %2676 = vst.msk [vmem:[%s2 + $0x50] sm:$0xff] %vm1958, %v2559
    %2677 = vst.msk [vmem:[%s2 + $0x58] sm:$0xff] %vm1958, %v2561
    %2678 = vst.msk [vmem:[%s2 + $0x60] sm:$0xff] %vm1958, %v2563
    %2679 = vst.msk [vmem:[%s2 + $0x68] sm:$0xff] %vm1958, %v2565
    %2680 = vst.msk [vmem:[%s2 + $0x70] sm:$0xff] %vm1958, %v2567
    %2681 = vst.msk [vmem:[%s2 + $0x78] sm:$0xff] %vm1958, %v2569
    %2682 = vst.msk [vmem:[%s2 + $0x80] sm:$0xff] %vm1958, %v2571
    %2683 = vst.msk [vmem:[%s2 + $0x88] sm:$0xff] %vm1958, %v2573
    %2684 = vst.msk [vmem:[%s2 + $0x90] sm:$0xff] %vm1958, %v2575
    %2685 = vst.msk [vmem:[%s2 + $0x98] sm:$0xff] %vm1958, %v2577
    %2686 = vst.msk [vmem:[%s2 + $0xa0] sm:$0xff] %vm1958, %v2579
    %2687 = vst.msk [vmem:[%s2 + $0xa8] sm:$0xff] %vm1958, %v2581
    %2688 = vst.msk [vmem:[%s2 + $0xb0] sm:$0xff] %vm1958, %v2583
    %2689 = vst.msk [vmem:[%s2 + $0xb8] sm:$0xff] %vm1958, %v2585
    %2690 = vst.msk [vmem:[%s2 + $0xc0] sm:$0xff] %vm1958, %v2587
    %2691 = vst.msk [vmem:[%s2 + $0xc8] sm:$0xff] %vm1958, %v2589
    %2692 = vst.msk [vmem:[%s2 + $0xd0] sm:$0xff] %vm1958, %v2591
    %2693 = vst.msk [vmem:[%s2 + $0xd8] sm:$0xff] %vm1958, %v2593
    %2694 = vst.msk [vmem:[%s2 + $0xe0] sm:$0xff] %vm1958, %v2595
    %2695 = vst.msk [vmem:[%s2 + $0xe8] sm:$0xff] %vm1958, %v2597
    %2696 = vst.msk [vmem:[%s2 + $0xf0] sm:$0xff] %vm1958, %v2599
    %2697 = vst.msk [vmem:[%s2 + $0xf8] sm:$0xff] %vm1958, %v2601
    %2698 = vst.msk [vmem:[%s2 + $0x100] sm:$0xff] %vm1958, %v2603
    %2699 = vst.msk [vmem:[%s2 + $0x108] sm:$0xff] %vm1958, %v2605
    %2700 = vst.msk [vmem:[%s2 + $0x110] sm:$0xff] %vm1958, %v2607
    %2701 = vst.msk [vmem:[%s2 + $0x118] sm:$0xff] %vm1958, %v2609
    %2702 = vst.msk [vmem:[%s2 + $0x120] sm:$0xff] %vm1958, %v2611
    %2703 = vst.msk [vmem:[%s2 + $0x128] sm:$0xff] %vm1958, %v2613
    %2704 = vst.msk [vmem:[%s2 + $0x130] sm:$0xff] %vm1958, %v2615
    %2705 = vst.msk [vmem:[%s2 + $0x138] sm:$0xff] %vm1958, %v2617
    %2706 = vst.msk [vmem:[%s2 + $0x140] sm:$0xff] %vm1958, %v2619
    %2707 = vst.msk [vmem:[%s2 + $0x148] sm:$0xff] %vm1958, %v2621
    %2708 = vst.msk [vmem:[%s2 + $0x150] sm:$0xff] %vm1958, %v2623
    %2709 = vst.msk [vmem:[%s2 + $0x158] sm:$0xff] %vm1958, %v2625
    %2710 = vst.msk [vmem:[%s2 + $0x160] sm:$0xff] %vm1958, %v2627
    %2711 = vst.msk [vmem:[%s2 + $0x168] sm:$0xff] %vm1958, %v2629
    %2712 = vst.msk [vmem:[%s2 + $0x170] sm:$0xff] %vm1958, %v2631
    %2713 = vst.msk [vmem:[%s2 + $0x178] sm:$0xff] %vm1958, %v2633
    %2714 = vst.msk [vmem:[%s2 + $0x180] sm:$0xff] %vm1958, %v2635
    %2715 = vst.msk [vmem:[%s2 + $0x188] sm:$0xff] %vm1958, %v2637
    %2716 = vst.msk [vmem:[%s2 + $0x190] sm:$0xff] %vm1958, %v2639
    %2717 = vst.msk [vmem:[%s2 + $0x198] sm:$0xff] %vm1958, %v2641
    %2718 = vst.msk [vmem:[%s2 + $0x1a0] sm:$0xff] %vm1958, %v2643
    %2719 = vst.msk [vmem:[%s2 + $0x1a8] sm:$0xff] %vm1958, %v2645
    %2720 = vst.msk [vmem:[%s2 + $0x1b0] sm:$0xff] %vm1958, %v2647
    %2721 = vst.msk [vmem:[%s2 + $0x1b8] sm:$0xff] %vm1958, %v2649
    %2722 = vst.msk [vmem:[%s2 + $0x1c0] sm:$0xff] %vm1958, %v2651
    %2723 = vst.msk [vmem:[%s2 + $0x1c8] sm:$0xff] %vm1958, %v2653
    %2724 = vst.msk [vmem:[%s2 + $0x1d0] sm:$0xff] %vm1958, %v2655
    %2725 = vst.msk [vmem:[%s2 + $0x1d8] sm:$0xff] %vm1958, %v2657
    %2726 = vst.msk [vmem:[%s2 + $0x1e0] sm:$0xff] %vm1958, %v2659
    %2727 = vst.msk [vmem:[%s2 + $0x1e8] sm:$0xff] %vm1958, %v2661
    %2728 = vst.msk [vmem:[%s2 + $0x1f0] sm:$0xff] %vm1958, %v2663
    %2729 = vst.msk [vmem:[%s2 + $0x1f8] sm:$0xff] %vm1958, %v2665
  $region17: #{segment_mean_padded.1} parent=0 // pred_fallthru
    _
  // Predicated region
  $region18: #{segment_mean_padded.1} parent=0 // pred_check
    _
  $region19: #{segment_mean_padded.1} parent=0 // pred_check_branch
    %2731 = sbr.rel (0) target = $region21
  $region20: #{segment_mean_padded.1} parent=0 // pred_region
    _
  $region21: #{segment_mean_padded.1} parent=0 // pred_fallthru
    _
  // Predicated region
  $region22: #{segment_mean_padded.1} parent=0 // pred_check
    _
  $region23: #{segment_mean_padded.1} parent=0 // pred_check_branch
    %2733 = sbr.rel (0) target = $region25
  $region24: #{segment_mean_padded.1} parent=0 // pred_region
    _
  $region25: #{segment_mean_padded.1} parent=0 // pred_fallthru
    _

</llo_original>
